<compile_context>
chip_gen: v7x
topology: tpu7x:2x2x1
jax: 0.10.0
libtpu: 0.0.40
codegen_flags: <defaults>
</compile_context>

<pallas_src>
import functools
import math

import jax
import jax.numpy as jnp
from jax import lax
from jax.experimental import pallas as pl
from jax.experimental.pallas import tpu as pltpu

_NEG_INF = -1e30  # large finite negative: avoids NaN on fully masked rows


def _mha_kernel(q_ref, k_ref, v_ref,
                wq_ref, bq_ref, wk_ref, bk_ref, wv_ref, bv_ref,
                wo_ref, bo_ref, attn_mask_ref, kpm_ref,
                out_ref, *rest,
                scaling: float, compute_dtype, heads_per_block: int,
                head_size: int, need_weights: bool):
    if need_weights:
        attnw_ref, acc_scr = rest
    else:
        attnw_ref = None
        acc_scr, = rest

    g = pl.program_id(2)                      # head-group index (reduction axis)
    last_g = pl.num_programs(2) - 1

    q = q_ref[0].astype(compute_dtype)        # (tq, H)
    k = k_ref[0].astype(compute_dtype)        # (Lk, H)
    v = v_ref[0].astype(compute_dtype)        # (Lk, H)

    wq = wq_ref[0]                            # (H, GW)   GW = heads_per_block * head_size
    wk = wk_ref[0]
    wv = wv_ref[0]
    wo = wo_ref[0]                            # (GW, H)

    # Group-wide projections: one wide-N MXU matmul per projection per step,
    # f32 accumulation. The 1/sqrt(hd) scale is folded into qp once.
    qp = (jnp.dot(q, wq, preferred_element_type=jnp.float32) + bq_ref[0]) * scaling
    kp = jnp.dot(k, wk, preferred_element_type=jnp.float32) + bk_ref[0]
    vp = jnp.dot(v, wv, preferred_element_type=jnp.float32) + bv_ref[0]

    # Combined additive mask (f32): attn_mask block + broadcast key-padding term.
    # Cheap VPU work; no (Lq, Lk) scratch.
    kpm_add = jnp.where(kpm_ref[0] != 0, jnp.float32(_NEG_INF), jnp.float32(0.0))  # (1, Lk)
    mask = attn_mask_ref[...] + kpm_add                                            # (tq, Lk)

    ctx_parts = []
    for i in range(heads_per_block):          # static unrolled per-head loop
        lo = i * head_size
        hi = lo + head_size
        qh = qp[:, lo:hi].astype(compute_dtype)      # (tq, hd)
        kh = kp[:, lo:hi].astype(compute_dtype)      # (Lk, hd)
        vh = vp[:, lo:hi].astype(compute_dtype)      # (Lk, hd)

        # scores = qh @ kh^T without materializing a transpose.
        s = lax.dot_general(qh, kh,
                            dimension_numbers=(((1,), (1,)), ((), ())),
                            preferred_element_type=jnp.float32)    # (tq, Lk)
        s = s + mask

        # Softmax over keys in f32; divide goes to the EUP via approx reciprocal.
        m = jnp.max(s, axis=-1, keepdims=True)
        e = jnp.exp(s - m)
        denom = jnp.sum(e, axis=-1, keepdims=True)
        attn = e * pl.reciprocal(denom, approx=True)               # (tq, Lk)

        if need_weights:
            attnw_ref[0, i] = attn.astype(attnw_ref.dtype)

        ctx = jnp.dot(attn.astype(compute_dtype), vh,
                      preferred_element_type=jnp.float32)          # (tq, hd)
        ctx_parts.append(ctx.astype(compute_dtype))

    ctx_g = ctx_parts[0] if heads_per_block == 1 else jnp.concatenate(ctx_parts, axis=-1)

    # One wide-K out-projection matmul per head group, accumulated in f32.
    contrib = jnp.dot(ctx_g, wo, preferred_element_type=jnp.float32)   # (tq, H)

    @pl.when(g == 0)
    def _():
        acc_scr[...] = jnp.zeros_like(acc_scr)

    acc_scr[...] += contrib

    @pl.when(g == last_g)
    def _():
        out_ref[0] = (acc_scr[...] + bo_ref[...]).astype(out_ref.dtype)


def _pick_q_tile(lq: int) -> int:
    if lq <= 256:
        return lq
    for t in (256, 128):
        if lq % t == 0:
            return t
    return lq


def _pick_heads_per_block(num_heads: int, head_size: int, target_width: int) -> int:
    for hpb in range(1, num_heads + 1):
        if num_heads % hpb == 0 and hpb * head_size >= target_width:
            return hpb
    return num_heads


def multi_head_attention(query, key, value, params,
                         attn_mask=None, key_padding_mask=None,
                         *, num_heads: int,
                         compute_dtype=jnp.bfloat16,
                         weights_dtype=jnp.bfloat16,
                         need_weights: bool = True,
                         mxu_target_width: int = 128):
    """query: (B, Lq, H); key/value: (B, Lk, H);
    attn_mask: (Lq, Lk) additive float (or None);
    key_padding_mask: (B, Lk) int/bool (nonzero = masked, or None).
    Returns (output (B, Lq, H), attn_weights (B, num_heads, Lq, Lk) or None)."""
    B, Lq, H = query.shape
    Lk = key.shape[1]
    assert H % num_heads == 0
    head_size = H // num_heads

    hpb = _pick_heads_per_block(num_heads, head_size, mxu_target_width)
    ng = num_heads // hpb
    gw = hpb * head_size
    tq = _pick_q_tile(Lq)
    n_lq = Lq // tq if Lq % tq == 0 else 1

    wq, bq, wk, bk, wv, bv, wo, bo = params

    # One-time parameter prep: group the projection weights by head-group.
    def group_in(w, b):
        wg = w.reshape(H, ng, gw).transpose(1, 0, 2).astype(compute_dtype)   # (NG, H, GW)
        bg = jnp.reshape(b, (ng, 1, gw)).astype(compute_dtype)               # (NG, 1, GW)
        return wg, bg

    wq_g, bq_g = group_in(wq, bq)
    wk_g, bk_g = group_in(wk, bk)
    wv_g, bv_g = group_in(wv, bv)
    wo_g = wo.reshape(ng, gw, H).astype(compute_dtype)                       # (NG, GW, H)
    bo_r = jnp.reshape(bo, (1, H)).astype(compute_dtype)

    if attn_mask is None:
        attn_mask = jnp.zeros((Lq, Lk), dtype=jnp.float32)
    attn_mask = attn_mask.astype(jnp.float32)
    if key_padding_mask is None:
        key_padding_mask = jnp.zeros((B, Lk), dtype=jnp.int32)
    kpm = key_padding_mask.astype(jnp.int32).reshape(B, 1, Lk)

    kernel = functools.partial(_mha_kernel,
                               scaling=float(head_size) ** -0.5,
                               compute_dtype=compute_dtype,
                               heads_per_block=hpb,
                               head_size=head_size,
                               need_weights=need_weights)

    grid = (B, n_lq, ng)

    head_w_spec = pl.BlockSpec((1, H, gw), lambda b, lq, g: (g, 0, 0))
    head_b_spec = pl.BlockSpec((1, 1, gw), lambda b, lq, g: (g, 0, 0))

    in_specs = [
        pl.BlockSpec((1, tq, H), lambda b, lq, g: (b, lq, 0)),      # query tile (resident over g)
        pl.BlockSpec((1, Lk, H), lambda b, lq, g: (b, 0, 0)),       # key       (resident over lq,g)
        pl.BlockSpec((1, Lk, H), lambda b, lq, g: (b, 0, 0)),       # value
        head_w_spec, head_b_spec,                                   # q_proj group
        head_w_spec, head_b_spec,                                   # k_proj group
        head_w_spec, head_b_spec,                                   # v_proj group
        pl.BlockSpec((1, gw, H), lambda b, lq, g: (g, 0, 0)),       # out_proj rows (per group)
        pl.BlockSpec((1, H), lambda b, lq, g: (0, 0)),              # out_proj bias
        pl.BlockSpec((tq, Lk), lambda b, lq, g: (lq, 0)),           # additive attn mask tile
        pl.BlockSpec((1, 1, Lk), lambda b, lq, g: (b, 0, 0)),       # key padding mask row
    ]

    out_spec = pl.BlockSpec((1, tq, H), lambda b, lq, g: (b, lq, 0))
    attnw_spec = pl.BlockSpec((1, hpb, tq, Lk), lambda b, lq, g: (b, g, lq, 0))

    if need_weights:
        out_shape = (jax.ShapeDtypeStruct((B, Lq, H), query.dtype),
                     jax.ShapeDtypeStruct((B, num_heads, Lq, Lk), weights_dtype))
        out_specs = [out_spec, attnw_spec]
    else:
        out_shape = jax.ShapeDtypeStruct((B, Lq, H), query.dtype)
        out_specs = out_spec

    scratch_shapes = [pltpu.VMEM((tq, H), jnp.float32)]             # f32 out-proj accumulator

    # VMEM budget from actual block sizes (double-buffered) + headroom, capped at
    # 64 MiB so the limit is also valid on v7x.
    def nbytes(shape, dtype):
        return math.prod(shape) * jnp.dtype(dtype).itemsize

    blk_bytes = (
        nbytes((1, tq, H), query.dtype) + 2 * nbytes((1, Lk, H), query.dtype)
        + 3 * (nbytes((1, H, gw), compute_dtype) + nbytes((1, 1, gw), compute_dtype))
        + nbytes((1, gw, H), compute_dtype) + nbytes((1, H), compute_dtype)
        + nbytes((tq, Lk), jnp.float32) + nbytes((1, 1, Lk), jnp.int32)
        + nbytes((1, tq, H), query.dtype)
        + (nbytes((1, hpb, tq, Lk), weights_dtype) if need_weights else 0)
    )
    scratch_bytes = nbytes((tq, H), jnp.float32)
    vmem_limit = 2 * blk_bytes + scratch_bytes + (8 << 20)
    vmem_limit = int(max(16 << 20, min(vmem_limit, 64 << 20)))

    result = pl.pallas_call(
        kernel,
        out_shape=out_shape,
        grid_spec=pltpu.PrefetchScalarGridSpec(
            num_scalar_prefetch=0,
            grid=grid,
            in_specs=in_specs,
            out_specs=out_specs,
            scratch_shapes=scratch_shapes,
        ),
        compiler_params=pltpu.CompilerParams(
            dimension_semantics=("parallel", "parallel", "arbitrary"),
            vmem_limit_bytes=vmem_limit,
        ),
    )(query, key, value,
      wq_g, bq_g, wk_g, bk_g, wv_g, bv_g, wo_g, bo_r,
      attn_mask, kpm)

    if need_weights:
        out, attnw = result
        return out, attnw
    return result, None


def _reference(query, key, value, params, attn_mask, key_padding_mask, num_heads):
    """Pure-JAX reference mirroring the PyTorch forward (eval mode)."""
    B, Lq, H = query.shape
    Lk = key.shape[1]
    hd = H // num_heads
    wq, bq, wk, bk, wv, bv, wo, bo = params
    q = (query @ wq + bq).reshape(B, Lq, num_heads, hd).transpose(0, 2, 1, 3)
    k = (key @ wk + bk).reshape(B, Lk, num_heads, hd).transpose(0, 2, 1, 3)
    v = (value @ wv + bv).reshape(B, Lk, num_heads, hd).transpose(0, 2, 1, 3)
    s = jnp.einsum('bhqd,bhkd->bhqk', q, k) * (hd ** -0.5)
    s = s + attn_mask[None, None]
    s = jnp.where((key_padding_mask != 0)[:, None, None, :], _NEG_INF, s)
    a = jax.nn.softmax(s, axis=-1)
    ctx = jnp.einsum('bhqk,bhkd->bhqd', a, v).transpose(0, 2, 1, 3).reshape(B, Lq, H)
    out = ctx @ wo + bo
    return out, a


if __name__ == "__main__":
    B, Lq, Lk, H, NH = 2, 8, 8, 32, 4

    key0 = jax.random.PRNGKey(0)
    ks = jax.random.split(key0, 12)

    query = jax.random.normal(ks[0], (B, Lq, H), dtype=jnp.float32)
    keyt = jax.random.normal(ks[1], (B, Lk, H), dtype=jnp.float32)
    value = jax.random.normal(ks[2], (B, Lk, H), dtype=jnp.float32)

    # Deterministic parameter init (shapes from nn.Linear(H, H, bias=True)).
    bound = 1.0 / math.sqrt(H)
    def lin(kw, kb):
        w = jax.random.uniform(kw, (H, H), minval=-bound, maxval=bound, dtype=jnp.float32)
        b = jax.random.uniform(kb, (1, H), minval=-bound, maxval=bound, dtype=jnp.float32)
        return w, b
    wq, bq = lin(ks[3], ks[4])
    wk, bk = lin(ks[5], ks[6])
    wv, bv = lin(ks[7], ks[8])
    wo, bo = lin(ks[9], ks[10])
    params = (wq, bq, wk, bk, wv, bv, wo, bo)

    # Additive attention mask (causal-style) and key padding mask (mask last key of batch 1).
    causal = jnp.triu(jnp.ones((Lq, Lk), dtype=jnp.float32), k=1) * (-1e9)
    kpm = jnp.zeros((B, Lk), dtype=jnp.int32).at[1, Lk - 1].set(1)

    ref_out, ref_attn = _reference(query, keyt, value, params, causal, kpm, NH)

    # 1) Default fast path: bf16 MXU feeds + bf16 attention-weight output.
    out, attnw = multi_head_attention(query, keyt, value, params, causal, kpm, num_heads=NH)
    out = jax.block_until_ready(out)
    attnw = jax.block_until_ready(attnw)
    assert out.shape == (B, Lq, H)
    assert attnw.shape == (B, NH, Lq, Lk)
    # bf16 feeds + bf16 weights output + approx reciprocal -> loose tolerance vs f32 reference.
    assert jnp.allclose(out.astype(jnp.float32), ref_out, atol=5e-2, rtol=5e-2)
    assert jnp.allclose(attnw.astype(jnp.float32), ref_attn, atol=2e-2, rtol=2e-2)

    # 2) need_weights=False path (skips the attnw HBM writeback) with f32 feeds: tight check.
    out2, none_w = multi_head_attention(query, keyt, value, params, causal, kpm, num_heads=NH,
                                        compute_dtype=jnp.float32, need_weights=False)
    out2 = jax.block_until_ready(out2)
    assert none_w is None
    assert jnp.allclose(out2, ref_out, atol=1e-2, rtol=1e-2)

    print("KERNEL_OK")
</pallas_src>

<mosaic_0001>
module attributes {stable_mosaic.version = 11 : i64} {
  func.func @_mha_kernel(%arg0: i32, %arg1: i32, %arg2: i32, %arg3: memref<1x8x32xf32, #tpu.memory_space<vmem>>, %arg4: memref<1x8x32xf32, #tpu.memory_space<vmem>>, %arg5: memref<1x8x32xf32, #tpu.memory_space<vmem>>, %arg6: memref<1x32x32xbf16, #tpu.memory_space<vmem>>, %arg7: memref<1x1x32xbf16, #tpu.memory_space<vmem>>, %arg8: memref<1x32x32xbf16, #tpu.memory_space<vmem>>, %arg9: memref<1x1x32xbf16, #tpu.memory_space<vmem>>, %arg10: memref<1x32x32xbf16, #tpu.memory_space<vmem>>, %arg11: memref<1x1x32xbf16, #tpu.memory_space<vmem>>, %arg12: memref<1x32x32xbf16, #tpu.memory_space<vmem>>, %arg13: memref<1x32xbf16, #tpu.memory_space<vmem>>, %arg14: memref<8x8xf32, #tpu.memory_space<vmem>>, %arg15: memref<1x1x8xi32, #tpu.memory_space<vmem>>, %arg16: memref<1x8x32xf32, #tpu.memory_space<vmem>>, %arg17: memref<1x4x8x8xbf16, #tpu.memory_space<vmem>>, %arg18: memref<8x32xf32, #tpu.memory_space<vmem>>) attributes {dimension_semantics = [#tpu.dimension_semantics<parallel>, #tpu.dimension_semantics<parallel>, #tpu.dimension_semantics<arbitrary>], iteration_bounds = array<i64: 2, 1, 1>, scalar_prefetch = 0 : i64, scratch_operands = 1 : i64, tpu.core_type = #tpu.core_type<tc>, window_params = [{transform_indices = @transform_0, window_bounds = array<i64: 1, 8, 32>}, {transform_indices = @transform_1, window_bounds = array<i64: 1, 8, 32>}, {transform_indices = @transform_2, window_bounds = array<i64: 1, 8, 32>}, {transform_indices = @transform_3, window_bounds = array<i64: 1, 32, 32>}, {transform_indices = @transform_4, window_bounds = array<i64: 1, 1, 32>}, {transform_indices = @transform_5, window_bounds = array<i64: 1, 32, 32>}, {transform_indices = @transform_6, window_bounds = array<i64: 1, 1, 32>}, {transform_indices = @transform_7, window_bounds = array<i64: 1, 32, 32>}, {transform_indices = @transform_8, window_bounds = array<i64: 1, 1, 32>}, {transform_indices = @transform_9, window_bounds = array<i64: 1, 32, 32>}, {pipeline_mode = #tpu.pipeline_mode<synchronous>, transform_indices = @transform_10, window_bounds = array<i64: 1, 32>}, {transform_indices = @transform_11, window_bounds = array<i64: 8, 8>}, {transform_indices = @transform_12, window_bounds = array<i64: 1, 1, 8>}, {transform_indices = @transform_13, window_bounds = array<i64: 1, 8, 32>}, {transform_indices = @transform_14, window_bounds = array<i64: 1, 4, 8, 8>}]} {
    %c0 = arith.constant 0 : index
    %c0_0 = arith.constant 0 : index
    %c0_1 = arith.constant 0 : index
    %0 = vector.load %arg3[%c0, %c0_0, %c0_1] : memref<1x8x32xf32, #tpu.memory_space<vmem>>, vector<1x8x32xf32>
    %1 = vector.shape_cast %0 : vector<1x8x32xf32> to vector<8x32xf32>
    %2 = arith.truncf %1 : vector<8x32xf32> to vector<8x32xbf16>
    %c0_2 = arith.constant 0 : index
    %c0_3 = arith.constant 0 : index
    %c0_4 = arith.constant 0 : index
    %3 = vector.load %arg4[%c0_2, %c0_3, %c0_4] : memref<1x8x32xf32, #tpu.memory_space<vmem>>, vector<1x8x32xf32>
    %4 = vector.shape_cast %3 : vector<1x8x32xf32> to vector<8x32xf32>
    %5 = arith.truncf %4 : vector<8x32xf32> to vector<8x32xbf16>
    %c0_5 = arith.constant 0 : index
    %c0_6 = arith.constant 0 : index
    %c0_7 = arith.constant 0 : index
    %6 = vector.load %arg5[%c0_5, %c0_6, %c0_7] : memref<1x8x32xf32, #tpu.memory_space<vmem>>, vector<1x8x32xf32>
    %7 = vector.shape_cast %6 : vector<1x8x32xf32> to vector<8x32xf32>
    %8 = arith.truncf %7 : vector<8x32xf32> to vector<8x32xbf16>
    %c0_8 = arith.constant 0 : index
    %c0_9 = arith.constant 0 : index
    %c0_10 = arith.constant 0 : index
    %9 = vector.load %arg6[%c0_8, %c0_9, %c0_10] : memref<1x32x32xbf16, #tpu.memory_space<vmem>>, vector<1x32x32xbf16>
    %10 = vector.shape_cast %9 : vector<1x32x32xbf16> to vector<32x32xbf16>
    %c0_11 = arith.constant 0 : index
    %c0_12 = arith.constant 0 : index
    %c0_13 = arith.constant 0 : index
    %11 = vector.load %arg8[%c0_11, %c0_12, %c0_13] : memref<1x32x32xbf16, #tpu.memory_space<vmem>>, vector<1x32x32xbf16>
    %12 = vector.shape_cast %11 : vector<1x32x32xbf16> to vector<32x32xbf16>
    %c0_14 = arith.constant 0 : index
    %c0_15 = arith.constant 0 : index
    %c0_16 = arith.constant 0 : index
    %13 = vector.load %arg10[%c0_14, %c0_15, %c0_16] : memref<1x32x32xbf16, #tpu.memory_space<vmem>>, vector<1x32x32xbf16>
    %14 = vector.shape_cast %13 : vector<1x32x32xbf16> to vector<32x32xbf16>
    %c0_17 = arith.constant 0 : index
    %c0_18 = arith.constant 0 : index
    %c0_19 = arith.constant 0 : index
    %15 = vector.load %arg12[%c0_17, %c0_18, %c0_19] : memref<1x32x32xbf16, #tpu.memory_space<vmem>>, vector<1x32x32xbf16>
    %16 = vector.shape_cast %15 : vector<1x32x32xbf16> to vector<32x32xbf16>
    %cst = arith.constant dense<0.000000e+00> : vector<8x32xf32>
    %17 = tpu.matmul %2, %10, %cst {dimension_numbers = #tpu.dot_dimension_numbers<[1], [0], [0], [1], [0, 0, 1, 1], [], []>} : vector<8x32xbf16>, vector<32x32xbf16>, vector<8x32xf32> -> vector<8x32xf32>
    %c0_20 = arith.constant 0 : index
    %c0_21 = arith.constant 0 : index
    %c0_22 = arith.constant 0 : index
    %18 = vector.load %arg7[%c0_20, %c0_21, %c0_22] : memref<1x1x32xbf16, #tpu.memory_space<vmem>>, vector<1x1x32xbf16>
    %19 = vector.shape_cast %18 : vector<1x1x32xbf16> to vector<1x32xbf16>
    %20 = arith.extf %19 : vector<1x32xbf16> to vector<1x32xf32>
    %21 = vector.broadcast %20 : vector<1x32xf32> to vector<8x32xf32>
    %22 = arith.addf %17, %21 : vector<8x32xf32>
    %cst_23 = arith.constant 0.353553385 : f32
    %23 = vector.broadcast %cst_23 : f32 to vector<8x32xf32>
    %24 = arith.mulf %22, %23 : vector<8x32xf32>
    %cst_24 = arith.constant dense<0.000000e+00> : vector<8x32xf32>
    %25 = tpu.matmul %5, %12, %cst_24 {dimension_numbers = #tpu.dot_dimension_numbers<[1], [0], [0], [1], [0, 0, 1, 1], [], []>} : vector<8x32xbf16>, vector<32x32xbf16>, vector<8x32xf32> -> vector<8x32xf32>
    %c0_25 = arith.constant 0 : index
    %c0_26 = arith.constant 0 : index
    %c0_27 = arith.constant 0 : index
    %26 = vector.load %arg9[%c0_25, %c0_26, %c0_27] : memref<1x1x32xbf16, #tpu.memory_space<vmem>>, vector<1x1x32xbf16>
    %27 = vector.shape_cast %26 : vector<1x1x32xbf16> to vector<1x32xbf16>
    %28 = arith.extf %27 : vector<1x32xbf16> to vector<1x32xf32>
    %29 = vector.broadcast %28 : vector<1x32xf32> to vector<8x32xf32>
    %30 = arith.addf %25, %29 : vector<8x32xf32>
    %cst_28 = arith.constant dense<0.000000e+00> : vector<8x32xf32>
    %31 = tpu.matmul %8, %14, %cst_28 {dimension_numbers = #tpu.dot_dimension_numbers<[1], [0], [0], [1], [0, 0, 1, 1], [], []>} : vector<8x32xbf16>, vector<32x32xbf16>, vector<8x32xf32> -> vector<8x32xf32>
    %c0_29 = arith.constant 0 : index
    %c0_30 = arith.constant 0 : index
    %c0_31 = arith.constant 0 : index
    %32 = vector.load %arg11[%c0_29, %c0_30, %c0_31] : memref<1x1x32xbf16, #tpu.memory_space<vmem>>, vector<1x1x32xbf16>
    %33 = vector.shape_cast %32 : vector<1x1x32xbf16> to vector<1x32xbf16>
    %34 = arith.extf %33 : vector<1x32xbf16> to vector<1x32xf32>
    %35 = vector.broadcast %34 : vector<1x32xf32> to vector<8x32xf32>
    %36 = arith.addf %31, %35 : vector<8x32xf32>
    %c0_32 = arith.constant 0 : index
    %c0_33 = arith.constant 0 : index
    %c0_34 = arith.constant 0 : index
    %37 = vector.load %arg15[%c0_32, %c0_33, %c0_34] : memref<1x1x8xi32, #tpu.memory_space<vmem>>, vector<1x1x8xi32>
    %38 = vector.shape_cast %37 : vector<1x1x8xi32> to vector<1x8xi32>
    %c0_i32 = arith.constant 0 : i32
    %39 = vector.broadcast %c0_i32 : i32 to vector<1x8xi32>
    %40 = arith.cmpi ne, %38, %39 : vector<1x8xi32>
    %cst_35 = arith.constant -1.000000e+30 : f32
    %cst_36 = arith.constant 0.000000e+00 : f32
    %41 = vector.broadcast %cst_35 : f32 to vector<1x8xf32>
    %42 = vector.broadcast %cst_36 : f32 to vector<1x8xf32>
    %43 = arith.select %40, %41, %42 : vector<1x8xi1>, vector<1x8xf32>
    %c0_37 = arith.constant 0 : index
    %c0_38 = arith.constant 0 : index
    %44 = vector.load %arg14[%c0_37, %c0_38] : memref<8x8xf32, #tpu.memory_space<vmem>>, vector<8x8xf32>
    %45 = vector.broadcast %43 : vector<1x8xf32> to vector<8x8xf32>
    %46 = arith.addf %44, %45 : vector<8x8xf32>
    %47 = vector.extract_strided_slice %24 {offsets = [0, 0], sizes = [8, 8], strides = [1, 1]} : vector<8x32xf32> to vector<8x8xf32>
    %48 = arith.truncf %47 : vector<8x8xf32> to vector<8x8xbf16>
    %49 = vector.extract_strided_slice %30 {offsets = [0, 0], sizes = [8, 8], strides = [1, 1]} : vector<8x32xf32> to vector<8x8xf32>
    %50 = arith.truncf %49 : vector<8x8xf32> to vector<8x8xbf16>
    %51 = vector.extract_strided_slice %36 {offsets = [0, 0], sizes = [8, 8], strides = [1, 1]} : vector<8x32xf32> to vector<8x8xf32>
    %52 = arith.truncf %51 : vector<8x8xf32> to vector<8x8xbf16>
    %cst_39 = arith.constant dense<0.000000e+00> : vector<8x8xf32>
    %53 = tpu.matmul %48, %50, %cst_39 {dimension_numbers = #tpu.dot_dimension_numbers<[1], [1], [0], [0], [0, 0, 1, 0], [], []>} : vector<8x8xbf16>, vector<8x8xbf16>, vector<8x8xf32> -> vector<8x8xf32>
    %54 = arith.addf %53, %46 : vector<8x8xf32>
    %cst_40 = arith.constant dense<0xFF800000> : vector<8xf32>
    %55 = vector.multi_reduction <maximumf>, %54, %cst_40 [1] : vector<8x8xf32> to vector<8xf32>
    %56 = vector.shape_cast %55 : vector<8xf32> to vector<8x1xf32>
    %57 = vector.broadcast %56 : vector<8x1xf32> to vector<8x8xf32>
    %58 = arith.subf %54, %57 : vector<8x8xf32>
    %59 = math.exp %58 : vector<8x8xf32>
    %cst_41 = arith.constant dense<0.000000e+00> : vector<8xf32>
    %60 = vector.multi_reduction <add>, %59, %cst_41 [1] : vector<8x8xf32> to vector<8xf32>
    %61 = vector.shape_cast %60 : vector<8xf32> to vector<8x1xf32>
    %62 = tpu.reciprocal %61 {approx = true} : vector<8x1xf32> -> vector<8x1xf32>
    %63 = vector.broadcast %62 : vector<8x1xf32> to vector<8x8xf32>
    %64 = arith.mulf %59, %63 : vector<8x8xf32>
    %65 = arith.truncf %64 : vector<8x8xf32> to vector<8x8xbf16>
    %c0_42 = arith.constant 0 : index
    %c0_43 = arith.constant 0 : index
    %c0_44 = arith.constant 0 : index
    %c0_45 = arith.constant 0 : index
    %66 = vector.load %arg17[%c0_42, %c0_43, %c0_44, %c0_45] : memref<1x4x8x8xbf16, #tpu.memory_space<vmem>>, vector<1x1x8x8xbf16>
    %67 = vector.shape_cast %66 : vector<1x1x8x8xbf16> to vector<8x8xbf16>
    %68 = vector.shape_cast %65 : vector<8x8xbf16> to vector<1x1x8x8xbf16>
    tpu.vector_store %arg17[%c0_42, %c0_43, %c0_44, %c0_45], %68 {strides = array<i32>} : memref<1x4x8x8xbf16, #tpu.memory_space<vmem>>, vector<1x1x8x8xbf16>,
    %69 = arith.truncf %64 : vector<8x8xf32> to vector<8x8xbf16>
    %cst_46 = arith.constant dense<0.000000e+00> : vector<8x8xf32>
    %70 = tpu.matmul %69, %52, %cst_46 {dimension_numbers = #tpu.dot_dimension_numbers<[1], [0], [0], [1], [0, 0, 1, 1], [], []>} : vector<8x8xbf16>, vector<8x8xbf16>, vector<8x8xf32> -> vector<8x8xf32>
    %71 = arith.truncf %70 : vector<8x8xf32> to vector<8x8xbf16>
    %72 = vector.extract_strided_slice %24 {offsets = [0, 8], sizes = [8, 8], strides = [1, 1]} : vector<8x32xf32> to vector<8x8xf32>
    %73 = arith.truncf %72 : vector<8x8xf32> to vector<8x8xbf16>
    %74 = vector.extract_strided_slice %30 {offsets = [0, 8], sizes = [8, 8], strides = [1, 1]} : vector<8x32xf32> to vector<8x8xf32>
    %75 = arith.truncf %74 : vector<8x8xf32> to vector<8x8xbf16>
    %76 = vector.extract_strided_slice %36 {offsets = [0, 8], sizes = [8, 8], strides = [1, 1]} : vector<8x32xf32> to vector<8x8xf32>
    %77 = arith.truncf %76 : vector<8x8xf32> to vector<8x8xbf16>
    %cst_47 = arith.constant dense<0.000000e+00> : vector<8x8xf32>
    %78 = tpu.matmul %73, %75, %cst_47 {dimension_numbers = #tpu.dot_dimension_numbers<[1], [1], [0], [0], [0, 0, 1, 0], [], []>} : vector<8x8xbf16>, vector<8x8xbf16>, vector<8x8xf32> -> vector<8x8xf32>
    %79 = arith.addf %78, %46 : vector<8x8xf32>
    %cst_48 = arith.constant dense<0xFF800000> : vector<8xf32>
    %80 = vector.multi_reduction <maximumf>, %79, %cst_48 [1] : vector<8x8xf32> to vector<8xf32>
    %81 = vector.shape_cast %80 : vector<8xf32> to vector<8x1xf32>
    %82 = vector.broadcast %81 : vector<8x1xf32> to vector<8x8xf32>
    %83 = arith.subf %79, %82 : vector<8x8xf32>
    %84 = math.exp %83 : vector<8x8xf32>
    %cst_49 = arith.constant dense<0.000000e+00> : vector<8xf32>
    %85 = vector.multi_reduction <add>, %84, %cst_49 [1] : vector<8x8xf32> to vector<8xf32>
    %86 = vector.shape_cast %85 : vector<8xf32> to vector<8x1xf32>
    %87 = tpu.reciprocal %86 {approx = true} : vector<8x1xf32> -> vector<8x1xf32>
    %88 = vector.broadcast %87 : vector<8x1xf32> to vector<8x8xf32>
    %89 = arith.mulf %84, %88 : vector<8x8xf32>
    %90 = arith.truncf %89 : vector<8x8xf32> to vector<8x8xbf16>
    %c0_50 = arith.constant 0 : index
    %c1 = arith.constant 1 : index
    %c0_51 = arith.constant 0 : index
    %c0_52 = arith.constant 0 : index
    %91 = vector.load %arg17[%c0_50, %c1, %c0_51, %c0_52] : memref<1x4x8x8xbf16, #tpu.memory_space<vmem>>, vector<1x1x8x8xbf16>
    %92 = vector.shape_cast %91 : vector<1x1x8x8xbf16> to vector<8x8xbf16>
    %93 = vector.shape_cast %90 : vector<8x8xbf16> to vector<1x1x8x8xbf16>
    tpu.vector_store %arg17[%c0_50, %c1, %c0_51, %c0_52], %93 {strides = array<i32>} : memref<1x4x8x8xbf16, #tpu.memory_space<vmem>>, vector<1x1x8x8xbf16>,
    %94 = arith.truncf %89 : vector<8x8xf32> to vector<8x8xbf16>
    %cst_53 = arith.constant dense<0.000000e+00> : vector<8x8xf32>
    %95 = tpu.matmul %94, %77, %cst_53 {dimension_numbers = #tpu.dot_dimension_numbers<[1], [0], [0], [1], [0, 0, 1, 1], [], []>} : vector<8x8xbf16>, vector<8x8xbf16>, vector<8x8xf32> -> vector<8x8xf32>
    %96 = arith.truncf %95 : vector<8x8xf32> to vector<8x8xbf16>
    %97 = vector.extract_strided_slice %24 {offsets = [0, 16], sizes = [8, 8], strides = [1, 1]} : vector<8x32xf32> to vector<8x8xf32>
    %98 = arith.truncf %97 : vector<8x8xf32> to vector<8x8xbf16>
    %99 = vector.extract_strided_slice %30 {offsets = [0, 16], sizes = [8, 8], strides = [1, 1]} : vector<8x32xf32> to vector<8x8xf32>
    %100 = arith.truncf %99 : vector<8x8xf32> to vector<8x8xbf16>
    %101 = vector.extract_strided_slice %36 {offsets = [0, 16], sizes = [8, 8], strides = [1, 1]} : vector<8x32xf32> to vector<8x8xf32>
    %102 = arith.truncf %101 : vector<8x8xf32> to vector<8x8xbf16>
    %cst_54 = arith.constant dense<0.000000e+00> : vector<8x8xf32>
    %103 = tpu.matmul %98, %100, %cst_54 {dimension_numbers = #tpu.dot_dimension_numbers<[1], [1], [0], [0], [0, 0, 1, 0], [], []>} : vector<8x8xbf16>, vector<8x8xbf16>, vector<8x8xf32> -> vector<8x8xf32>
    %104 = arith.addf %103, %46 : vector<8x8xf32>
    %cst_55 = arith.constant dense<0xFF800000> : vector<8xf32>
    %105 = vector.multi_reduction <maximumf>, %104, %cst_55 [1] : vector<8x8xf32> to vector<8xf32>
    %106 = vector.shape_cast %105 : vector<8xf32> to vector<8x1xf32>
    %107 = vector.broadcast %106 : vector<8x1xf32> to vector<8x8xf32>
    %108 = arith.subf %104, %107 : vector<8x8xf32>
    %109 = math.exp %108 : vector<8x8xf32>
    %cst_56 = arith.constant dense<0.000000e+00> : vector<8xf32>
    %110 = vector.multi_reduction <add>, %109, %cst_56 [1] : vector<8x8xf32> to vector<8xf32>
    %111 = vector.shape_cast %110 : vector<8xf32> to vector<8x1xf32>
    %112 = tpu.reciprocal %111 {approx = true} : vector<8x1xf32> -> vector<8x1xf32>
    %113 = vector.broadcast %112 : vector<8x1xf32> to vector<8x8xf32>
    %114 = arith.mulf %109, %113 : vector<8x8xf32>
    %115 = arith.truncf %114 : vector<8x8xf32> to vector<8x8xbf16>
    %c0_57 = arith.constant 0 : index
    %c2 = arith.constant 2 : index
    %c0_58 = arith.constant 0 : index
    %c0_59 = arith.constant 0 : index
    %116 = vector.load %arg17[%c0_57, %c2, %c0_58, %c0_59] : memref<1x4x8x8xbf16, #tpu.memory_space<vmem>>, vector<1x1x8x8xbf16>
    %117 = vector.shape_cast %116 : vector<1x1x8x8xbf16> to vector<8x8xbf16>
    %118 = vector.shape_cast %115 : vector<8x8xbf16> to vector<1x1x8x8xbf16>
    tpu.vector_store %arg17[%c0_57, %c2, %c0_58, %c0_59], %118 {strides = array<i32>} : memref<1x4x8x8xbf16, #tpu.memory_space<vmem>>, vector<1x1x8x8xbf16>,
    %119 = arith.truncf %114 : vector<8x8xf32> to vector<8x8xbf16>
    %cst_60 = arith.constant dense<0.000000e+00> : vector<8x8xf32>
    %120 = tpu.matmul %119, %102, %cst_60 {dimension_numbers = #tpu.dot_dimension_numbers<[1], [0], [0], [1], [0, 0, 1, 1], [], []>} : vector<8x8xbf16>, vector<8x8xbf16>, vector<8x8xf32> -> vector<8x8xf32>
    %121 = arith.truncf %120 : vector<8x8xf32> to vector<8x8xbf16>
    %122 = vector.extract_strided_slice %24 {offsets = [0, 24], sizes = [8, 8], strides = [1, 1]} : vector<8x32xf32> to vector<8x8xf32>
    %123 = arith.truncf %122 : vector<8x8xf32> to vector<8x8xbf16>
    %124 = vector.extract_strided_slice %30 {offsets = [0, 24], sizes = [8, 8], strides = [1, 1]} : vector<8x32xf32> to vector<8x8xf32>
    %125 = arith.truncf %124 : vector<8x8xf32> to vector<8x8xbf16>
    %126 = vector.extract_strided_slice %36 {offsets = [0, 24], sizes = [8, 8], strides = [1, 1]} : vector<8x32xf32> to vector<8x8xf32>
    %127 = arith.truncf %126 : vector<8x8xf32> to vector<8x8xbf16>
    %cst_61 = arith.constant dense<0.000000e+00> : vector<8x8xf32>
    %128 = tpu.matmul %123, %125, %cst_61 {dimension_numbers = #tpu.dot_dimension_numbers<[1], [1], [0], [0], [0, 0, 1, 0], [], []>} : vector<8x8xbf16>, vector<8x8xbf16>, vector<8x8xf32> -> vector<8x8xf32>
    %129 = arith.addf %128, %46 : vector<8x8xf32>
    %cst_62 = arith.constant dense<0xFF800000> : vector<8xf32>
    %130 = vector.multi_reduction <maximumf>, %129, %cst_62 [1] : vector<8x8xf32> to vector<8xf32>
    %131 = vector.shape_cast %130 : vector<8xf32> to vector<8x1xf32>
    %132 = vector.broadcast %131 : vector<8x1xf32> to vector<8x8xf32>
    %133 = arith.subf %129, %132 : vector<8x8xf32>
    %134 = math.exp %133 : vector<8x8xf32>
    %cst_63 = arith.constant dense<0.000000e+00> : vector<8xf32>
    %135 = vector.multi_reduction <add>, %134, %cst_63 [1] : vector<8x8xf32> to vector<8xf32>
    %136 = vector.shape_cast %135 : vector<8xf32> to vector<8x1xf32>
    %137 = tpu.reciprocal %136 {approx = true} : vector<8x1xf32> -> vector<8x1xf32>
    %138 = vector.broadcast %137 : vector<8x1xf32> to vector<8x8xf32>
    %139 = arith.mulf %134, %138 : vector<8x8xf32>
    %140 = arith.truncf %139 : vector<8x8xf32> to vector<8x8xbf16>
    %c0_64 = arith.constant 0 : index
    %c3 = arith.constant 3 : index
    %c0_65 = arith.constant 0 : index
    %c0_66 = arith.constant 0 : index
    %141 = vector.load %arg17[%c0_64, %c3, %c0_65, %c0_66] : memref<1x4x8x8xbf16, #tpu.memory_space<vmem>>, vector<1x1x8x8xbf16>
    %142 = vector.shape_cast %141 : vector<1x1x8x8xbf16> to vector<8x8xbf16>
    %143 = vector.shape_cast %140 : vector<8x8xbf16> to vector<1x1x8x8xbf16>
    tpu.vector_store %arg17[%c0_64, %c3, %c0_65, %c0_66], %143 {strides = array<i32>} : memref<1x4x8x8xbf16, #tpu.memory_space<vmem>>, vector<1x1x8x8xbf16>,
    %144 = arith.truncf %139 : vector<8x8xf32> to vector<8x8xbf16>
    %cst_67 = arith.constant dense<0.000000e+00> : vector<8x8xf32>
    %145 = tpu.matmul %144, %127, %cst_67 {dimension_numbers = #tpu.dot_dimension_numbers<[1], [0], [0], [1], [0, 0, 1, 1], [], []>} : vector<8x8xbf16>, vector<8x8xbf16>, vector<8x8xf32> -> vector<8x8xf32>
    %146 = arith.truncf %145 : vector<8x8xf32> to vector<8x8xbf16>
    %147 = tpu.concatenate %71, %96, %121, %146 in 1 : vector<8x8xbf16>, vector<8x8xbf16>, vector<8x8xbf16>, vector<8x8xbf16> -> vector<8x32xbf16>
    %cst_68 = arith.constant dense<0.000000e+00> : vector<8x32xf32>
    %148 = tpu.matmul %147, %16, %cst_68 {dimension_numbers = #tpu.dot_dimension_numbers<[1], [0], [0], [1], [0, 0, 1, 1], [], []>} : vector<8x32xbf16>, vector<32x32xbf16>, vector<8x32xf32> -> vector<8x32xf32>
    %c0_i32_69 = arith.constant 0 : i32
    %149 = arith.cmpi eq, %arg2, %c0_i32_69 : i32
    %150 = arith.extui %149 : i1 to i32
    %c0_i32_70 = arith.constant 0 : i32
    %151 = arith.cmpi ne, %150, %c0_i32_70 : i32
    scf.if %151 {
      %cst_77 = arith.constant 0.000000e+00 : f32
      %158 = vector.broadcast %cst_77 : f32 to vector<8x32xf32>
      %c0_78 = arith.constant 0 : index
      %c0_79 = arith.constant 0 : index
      %159 = vector.load %arg18[%c0_78, %c0_79] : memref<8x32xf32, #tpu.memory_space<vmem>>, vector<8x32xf32>
      tpu.vector_store %arg18[%c0_78, %c0_79], %158 {strides = array<i32>} : memref<8x32xf32, #tpu.memory_space<vmem>>, vector<8x32xf32>,
    } else {
    }
    %c0_71 = arith.constant 0 : index
    %c0_72 = arith.constant 0 : index
    %152 = vector.load %arg18[%c0_71, %c0_72] : memref<8x32xf32, #tpu.memory_space<vmem>>, vector<8x32xf32>
    %153 = arith.addf %152, %148 : vector<8x32xf32>
    %c0_73 = arith.constant 0 : index
    %c0_74 = arith.constant 0 : index
    %154 = vector.load %arg18[%c0_73, %c0_74] : memref<8x32xf32, #tpu.memory_space<vmem>>, vector<8x32xf32>
    tpu.vector_store %arg18[%c0_73, %c0_74], %153 {strides = array<i32>} : memref<8x32xf32, #tpu.memory_space<vmem>>, vector<8x32xf32>,
    %c0_i32_75 = arith.constant 0 : i32
    %155 = arith.cmpi eq, %arg2, %c0_i32_75 : i32
    %156 = arith.extui %155 : i1 to i32
    %c0_i32_76 = arith.constant 0 : i32
    %157 = arith.cmpi ne, %156, %c0_i32_76 : i32
    scf.if %157 {
      %c0_77 = arith.constant 0 : index
      %c0_78 = arith.constant 0 : index
      %158 = vector.load %arg18[%c0_77, %c0_78] : memref<8x32xf32, #tpu.memory_space<vmem>>, vector<8x32xf32>
      %c0_79 = arith.constant 0 : index
      %c0_80 = arith.constant 0 : index
      %159 = vector.load %arg13[%c0_79, %c0_80] : memref<1x32xbf16, #tpu.memory_space<vmem>>, vector<1x32xbf16>
      %160 = arith.extf %159 : vector<1x32xbf16> to vector<1x32xf32>
      %161 = vector.broadcast %160 : vector<1x32xf32> to vector<8x32xf32>
      %162 = arith.addf %158, %161 : vector<8x32xf32>
      %c0_81 = arith.constant 0 : index
      %c0_82 = arith.constant 0 : index
      %c0_83 = arith.constant 0 : index
      %163 = vector.load %arg16[%c0_81, %c0_82, %c0_83] : memref<1x8x32xf32, #tpu.memory_space<vmem>>, vector<1x8x32xf32>
      %164 = vector.shape_cast %163 : vector<1x8x32xf32> to vector<8x32xf32>
      %165 = vector.shape_cast %162 : vector<8x32xf32> to vector<1x8x32xf32>
      tpu.vector_store %arg16[%c0_81, %c0_82, %c0_83], %165 {strides = array<i32>} : memref<1x8x32xf32, #tpu.memory_space<vmem>>, vector<1x8x32xf32>,
    } else {
    }
    return
  }
  func.func @transform_0(%arg0: i32, %arg1: i32, %arg2: i32) -> (i32, i32, i32) {
    %c0_i32 = arith.constant 0 : i32
    %c0_i32_0 = arith.constant 0 : i32
    return %arg0, %arg1, %c0_i32 : i32, i32, i32
  }
  func.func @transform_1(%arg0: i32, %arg1: i32, %arg2: i32) -> (i32, i32, i32) {
    %c0_i32 = arith.constant 0 : i32
    %c0_i32_0 = arith.constant 0 : i32
    %c0_i32_1 = arith.constant 0 : i32
    return %arg0, %c0_i32, %c0_i32_0 : i32, i32, i32
  }
  func.func @transform_2(%arg0: i32, %arg1: i32, %arg2: i32) -> (i32, i32, i32) {
    %c0_i32 = arith.constant 0 : i32
    %c0_i32_0 = arith.constant 0 : i32
    %c0_i32_1 = arith.constant 0 : i32
    return %arg0, %c0_i32, %c0_i32_0 : i32, i32, i32
  }
  func.func @transform_3(%arg0: i32, %arg1: i32, %arg2: i32) -> (i32, i32, i32) {
    %c0_i32 = arith.constant 0 : i32
    %c0_i32_0 = arith.constant 0 : i32
    %c0_i32_1 = arith.constant 0 : i32
    return %arg2, %c0_i32, %c0_i32_0 : i32, i32, i32
  }
  func.func @transform_4(%arg0: i32, %arg1: i32, %arg2: i32) -> (i32, i32, i32) {
    %c0_i32 = arith.constant 0 : i32
    %c0_i32_0 = arith.constant 0 : i32
    %c0_i32_1 = arith.constant 0 : i32
    return %arg2, %c0_i32, %c0_i32_0 : i32, i32, i32
  }
  func.func @transform_5(%arg0: i32, %arg1: i32, %arg2: i32) -> (i32, i32, i32) {
    %c0_i32 = arith.constant 0 : i32
    %c0_i32_0 = arith.constant 0 : i32
    %c0_i32_1 = arith.constant 0 : i32
    return %arg2, %c0_i32, %c0_i32_0 : i32, i32, i32
  }
  func.func @transform_6(%arg0: i32, %arg1: i32, %arg2: i32) -> (i32, i32, i32) {
    %c0_i32 = arith.constant 0 : i32
    %c0_i32_0 = arith.constant 0 : i32
    %c0_i32_1 = arith.constant 0 : i32
    return %arg2, %c0_i32, %c0_i32_0 : i32, i32, i32
  }
  func.func @transform_7(%arg0: i32, %arg1: i32, %arg2: i32) -> (i32, i32, i32) {
    %c0_i32 = arith.constant 0 : i32
    %c0_i32_0 = arith.constant 0 : i32
    %c0_i32_1 = arith.constant 0 : i32
    return %arg2, %c0_i32, %c0_i32_0 : i32, i32, i32
  }
  func.func @transform_8(%arg0: i32, %arg1: i32, %arg2: i32) -> (i32, i32, i32) {
    %c0_i32 = arith.constant 0 : i32
    %c0_i32_0 = arith.constant 0 : i32
    %c0_i32_1 = arith.constant 0 : i32
    return %arg2, %c0_i32, %c0_i32_0 : i32, i32, i32
  }
  func.func @transform_9(%arg0: i32, %arg1: i32, %arg2: i32) -> (i32, i32, i32) {
    %c0_i32 = arith.constant 0 : i32
    %c0_i32_0 = arith.constant 0 : i32
    %c0_i32_1 = arith.constant 0 : i32
    return %arg2, %c0_i32, %c0_i32_0 : i32, i32, i32
  }
  func.func @transform_10(%arg0: i32, %arg1: i32, %arg2: i32) -> (i32, i32) {
    %c0_i32 = arith.constant 0 : i32
    %c0_i32_0 = arith.constant 0 : i32
    %c0_i32_1 = arith.constant 0 : i32
    return %c0_i32, %c0_i32_0 : i32, i32
  }
  func.func @transform_11(%arg0: i32, %arg1: i32, %arg2: i32) -> (i32, i32) {
    %c0_i32 = arith.constant 0 : i32
    %c0_i32_0 = arith.constant 0 : i32
    return %arg1, %c0_i32 : i32, i32
  }
  func.func @transform_12(%arg0: i32, %arg1: i32, %arg2: i32) -> (i32, i32, i32) {
    %c0_i32 = arith.constant 0 : i32
    %c0_i32_0 = arith.constant 0 : i32
    %c0_i32_1 = arith.constant 0 : i32
    return %arg0, %c0_i32, %c0_i32_0 : i32, i32, i32
  }
  func.func @transform_13(%arg0: i32, %arg1: i32, %arg2: i32) -> (i32, i32, i32) {
    %c0_i32 = arith.constant 0 : i32
    %c0_i32_0 = arith.constant 0 : i32
    return %arg0, %arg1, %c0_i32 : i32, i32, i32
  }
  func.func @transform_14(%arg0: i32, %arg1: i32, %arg2: i32) -> (i32, i32, i32, i32) {
    %c0_i32 = arith.constant 0 : i32
    %c0_i32_0 = arith.constant 0 : i32
    return %arg0, %arg2, %arg1, %c0_i32 : i32, i32, i32, i32
  }
}

</mosaic_0001>

<llo_original>
// kernel: tpu_custom_call.1
$region0: #{tpu_custom_call.1}
  #allocation0 [shape = 'u32[]', space=smem, size = 0x4, offset = 0x4, fixed_abs, tag = 'smem constant byte address 0x4 - core index']
  #allocation1 [shape = 'u32[144,128]{1,0:T(1,128)}', space=vmem, size = 0x12000, scoped, tag = 'internal scratch']
  #allocation2 [shape = 'f32[8,32]{1,0:T(8,128)}', space=vmem, size = 0x1000, scoped, tag = 'scratch operand']
  %s0 = inlined_call_operand.hbm [shape: f32[2,8,32], index: 0, kind: input, shape index: {}]
  %s1 = inlined_call_operand.hbm [shape: f32[2,8,32], index: 1, kind: input, shape index: {}]
  %s2 = inlined_call_operand.hbm [shape: f32[2,8,32], index: 2, kind: input, shape index: {}]
  %s3 = inlined_call_operand.hbm [shape: bf16[1,32,32], index: 3, kind: input, shape index: {}]
  %s4 = inlined_call_operand.vmem [shape: bf16[1,1,32], index: 4, kind: input, shape index: {}]
  %s5 = inlined_call_operand.vmem [shape: bf16[1,32,32], index: 5, kind: input, shape index: {}]
  %s6 = inlined_call_operand.hbm [shape: bf16[1,1,32], index: 6, kind: input, shape index: {}]
  %s7 = inlined_call_operand.hbm [shape: bf16[1,32,32], index: 7, kind: input, shape index: {}]
  %s8 = inlined_call_operand.hbm [shape: bf16[1,1,32], index: 8, kind: input, shape index: {}]
  %s9 = inlined_call_operand.vmem [shape: bf16[1,32,32], index: 9, kind: input, shape index: {}]
  %s10 = inlined_call_operand.hbm [shape: bf16[1,32], index: 10, kind: input, shape index: {}]
  %s11 = inlined_call_operand.vmem [shape: f32[8,8], index: 11, kind: input, shape index: {}]
  %s12 = inlined_call_operand.vmem [shape: s32[2,1,8], index: 12, kind: input, shape index: {}]
  %s13 = inlined_call_operand.hbm [shape: f32[2,8,32], index: 13, kind: output, shape index: {0}]
  %s14 = inlined_call_operand.hbm [shape: bf16[2,4,8,8], index: 14, kind: output, shape index: {1}]
  %15 = xla_tuple %s13, %s14
  %s16 = sld [smem:[#allocation0]]
  $region133: #{tpu_custom_call.1} parent=0
    _
  %s18 = ssub.s32 1, %s16
  %s19 = scalar_select 0, %s18, %s16
  $region1: #{tpu_custom_call.1} parent=0
    #allocation3 [shape = 'u8[8192]{0}', space=vmem, size = 0x2000, scoped, tag = 'input window, operand 0']
    #allocation4 [shape = 's32[2]{0}', space=sflag, size = 0x8, scoped, tag = 'scoped memory for tpu_custom_call.1']
    #allocation5 [shape = 's32[2]{0}', space=sflag, size = 0x8, scoped, tag = 'scoped memory for tpu_custom_call.1']
    #allocation6 [shape = 'u8[8192]{0}', space=vmem, size = 0x2000, scoped, tag = 'input window, operand 1']
    #allocation7 [shape = 's32[2]{0}', space=sflag, size = 0x8, scoped, tag = 'scoped memory for tpu_custom_call.1']
    #allocation8 [shape = 'u8[8192]{0}', space=vmem, size = 0x2000, scoped, tag = 'input window, operand 2']
    #allocation9 [shape = 'u8[8192]{0}', space=vmem, size = 0x2000, scoped, tag = 'input window, operand 3, single buffered']
    #allocation10 [shape = 's32[1]{0}', space=sflag, size = 0x4, scoped, tag = 'scoped memory for tpu_custom_call.1']
    #allocation11 [shape = 'u8[512]{0}', space=vmem, size = 0x400, scoped, tag = 'input window, operand 6, single buffered']
    #allocation12 [shape = 'u8[8192]{0}', space=vmem, size = 0x2000, scoped, tag = 'input window, operand 7, single buffered']
    #allocation13 [shape = 's32[1]{0}', space=sflag, size = 0x4, scoped, tag = 'scoped memory for tpu_custom_call.1']
    #allocation14 [shape = 'u8[512]{0}', space=vmem, size = 0x400, scoped, tag = 'input window, operand 8, single buffered']
    #allocation15 [shape = 'u8[512]{0}', space=vmem, size = 0x400, scoped, tag = 'input window, operand 10, single buffered']
    #allocation16 [shape = 's32[1]{0}', space=sflag, size = 0x4, scoped, tag = 'scoped memory for tpu_custom_call.1']
    #allocation17 [shape = 'u8[8192]{0}', space=vmem, size = 0x2000, scoped, tag = 'output window, operand 0']
    #allocation18 [shape = 'u8[16384]{0}', space=vmem, size = 0x4000, scoped, tag = 'output window, operand 1']
    #allocation19 [shape = 's32[2]{0}', space=sflag, size = 0x8, scoped, tag = 'scoped memory for tpu_custom_call.1']
    %20 = vsyncpa [#allocation4], 0
    %s21 = scalar_lea.sflag [#allocation4], 1
    %22 = vsyncpa %s21, 0
    %23 = vsyncpa [#allocation7], 0
    %s24 = scalar_lea.sflag [#allocation7], 1
    %25 = vsyncpa %s24, 0
    %26 = vsyncpa [#allocation10], 0
    %27 = vsyncpa [#allocation13], 0
    %28 = vsyncpa [#allocation16], 0
    %29 = vsyncpa [#allocation5], 0
    %s30 = scalar_lea.sflag [#allocation5], 1
    %31 = vsyncpa %s30, 0
    %32 = vsyncpa [#allocation19], 0
    %s33 = scalar_lea.sflag [#allocation19], 1
    %34 = vsyncpa %s33, 0
    loop: start=0, step=1, limit=4
    $region2: #{tpu_custom_call.1} parent=1 // loop_pre_header
      _
    $region3: #{tpu_custom_call.1} parent=1 // loop_header
      %s36 = sphi 0, %s40
      %p37 = scmp.ge.s32.totalorder %s36, 4
      %s43 = sphi 0, %s62
      %s44 = sphi 0, %s58
      %s45 = sphi 0, %s54
      %s46 = sphi 0, %s43
      %s47 = sphi 0, %s44
      %s48 = sphi 0, %s45
      %s49 = sphi 0, %s46
      %s50 = sphi 0, %s47
      %s51 = sphi 0, %s48
      %s67 = sphi 0, %s69
      %s70 = sphi 0, %s67
      %s71 = sphi 0, %s70
      %s87 = sphi 0, %s71
      %s93 = sphi 0, %s95
      %s96 = sphi 0, %s93
      %s97 = sphi 0, %s96
      %s113 = sphi 0, %s97
      %s119 = sphi 0, %s121
      %s122 = sphi 0, %s119
      %s123 = sphi 0, %s122
      %s139 = sphi 0, %s123
      %s145 = sphi 0, %s147
      %s148 = sphi 0, %s145
      %s149 = sphi 0, %s148
      %s165 = sphi 0, %s149
      %s171 = sphi 0, %s173
      %s174 = sphi 0, %s171
      %s175 = sphi 0, %s174
      %s191 = sphi 0, %s175
      %s197 = sphi 0, %s199
      %s200 = sphi 0, %s197
      %s201 = sphi 0, %s200
      %s217 = sphi 0, %s201
      %s223 = sphi 0, %s225
      %s226 = sphi 0, %s223
      %s227 = sphi 0, %s226
      %s243 = sphi 0, %s227
      %s249 = sphi 0, %s251
      %s252 = sphi 0, %s249
      %s253 = sphi 0, %s252
      %s269 = sphi 0, %s253
      %s275 = sphi 0, %s277
      %s278 = sphi 0, %s275
      %s279 = sphi 0, %s278
      %s295 = sphi 0, %s279
      %s301 = sphi 0, %s303
      %s304 = sphi 0, %s301
      %s305 = sphi 0, %s304
      %s321 = sphi 0, %s305
      %s325 = sphi 0, %s325
      %s327 = sphi 0, %s325
      %s328 = sphi 0, %s327
      %s342 = sphi 0, %s328
      %s348 = sphi 0, %s350
      %s351 = sphi 0, %s348
      %s352 = sphi 0, %s351
      %s368 = sphi 0, %s352
      %s374 = sphi 0, %s376
      %s377 = sphi 0, %s374
      %s378 = sphi 0, %s377
      %s394 = sphi 0, %s378
      %s402 = sphi 0, %s404
      %s405 = sphi 0, %s402
      %s406 = sphi 0, %s405
      %s422 = sphi 0, %s406
      %s432 = sphi 0, %s434
      %s435 = sphi 0, %s432
      %s436 = sphi 0, %s435
      %s452 = sphi 0, %s436
    $region4: #{tpu_custom_call.1} parent=1 // loop_header_branch
      %39 = sbr.rel (%p37) target = $region8
    $region5: #{tpu_custom_call.1} parent=1 // loop_body
      %s41 = ssub.s32 %s36, 1
      %s42 = ssub.s32 %s36, 2
      %s52 = sadd.s32 1, %s45
      %p53 = scmp.ge.s32.totalorder %s52, 1
      %s54 = scalar_select %p53, 0, %s52
      %s55 = sadd.s32 1, %s44
      %s56 = scalar_select %p53, %s55, %s44
      %p57 = scmp.ge.s32.totalorder %s56, 1
      %s58 = scalar_select %p57, 0, %s56
      %s59 = sadd.s32 1, %s43
      %s60 = scalar_select %p57, %s59, %s43
      %p61 = scmp.ge.s32.totalorder %s60, 2
      %s62 = scalar_select %p61, 0, %s60
      %s63 = ssub.s32 %s43, %s62
      %s64 = ssub.s32 %s44, %s58
      %s65 = sor.u32 %s63, %s64
      %p66 = scmp.eq.s32.totalorder %s65, 0
      %s68 = sadd.s32 %s67, 1
      %s69 = scalar_select %p66, %s67, %s68
      %p72 = pneg %p66
      %p73 = scmp.eq.s32.totalorder %s36, 1
      %p74 = por %p72, %p73
      %p75 = scmp.ne.s32.totalorder %s67, %s70
      %p76 = scmp.eq.s32.totalorder %s36, 0
      %p77 = por %p75, %p76
      %p78 = scmp.ne.s32.totalorder %s67, %s70
      %p79 = scmp.eq.s32.totalorder %s41, 1
      %p80 = por %p78, %p79
      %p81 = scmp.ne.s32.totalorder %s70, %s71
      %p82 = scmp.eq.s32.totalorder %s41, 0
      %p83 = por %p81, %p82
      %p84 = scmp.ne.s32.totalorder %s70, %s71
      %p85 = scmp.eq.s32.totalorder %s42, 1
      %p86 = por %p84, %p85
      %p88 = scmp.ne.s32.totalorder %s71, %s87
      %p89 = scmp.eq.s32.totalorder %s42, 0
      %p90 = por %p88, %p89
      %s91 = ssub.s32 %s43, %s62
      %p92 = scmp.eq.s32.totalorder %s91, 0
      %s94 = sadd.s32 %s93, 1
      %s95 = scalar_select %p92, %s93, %s94
      %p98 = pneg %p92
      %p99 = scmp.eq.s32.totalorder %s36, 1
      %p100 = por %p98, %p99
      %p101 = scmp.ne.s32.totalorder %s93, %s96
      %p102 = scmp.eq.s32.totalorder %s36, 0
      %p103 = por %p101, %p102
      %p104 = scmp.ne.s32.totalorder %s93, %s96
      %p105 = scmp.eq.s32.totalorder %s41, 1
      %p106 = por %p104, %p105
      %p107 = scmp.ne.s32.totalorder %s96, %s97
      %p108 = scmp.eq.s32.totalorder %s41, 0
      %p109 = por %p107, %p108
      %p110 = scmp.ne.s32.totalorder %s96, %s97
      %p111 = scmp.eq.s32.totalorder %s42, 1
      %p112 = por %p110, %p111
      %p114 = scmp.ne.s32.totalorder %s97, %s113
      %p115 = scmp.eq.s32.totalorder %s42, 0
      %p116 = por %p114, %p115
      %s117 = ssub.s32 %s43, %s62
      %p118 = scmp.eq.s32.totalorder %s117, 0
      %s120 = sadd.s32 %s119, 1
      %s121 = scalar_select %p118, %s119, %s120
      %p124 = pneg %p118
      %p125 = scmp.eq.s32.totalorder %s36, 1
      %p126 = por %p124, %p125
      %p127 = scmp.ne.s32.totalorder %s119, %s122
      %p128 = scmp.eq.s32.totalorder %s36, 0
      %p129 = por %p127, %p128
      %p130 = scmp.ne.s32.totalorder %s119, %s122
      %p131 = scmp.eq.s32.totalorder %s41, 1
      %p132 = por %p130, %p131
      %p133 = scmp.ne.s32.totalorder %s122, %s123
      %p134 = scmp.eq.s32.totalorder %s41, 0
      %p135 = por %p133, %p134
      %p136 = scmp.ne.s32.totalorder %s122, %s123
      %p137 = scmp.eq.s32.totalorder %s42, 1
      %p138 = por %p136, %p137
      %p140 = scmp.ne.s32.totalorder %s123, %s139
      %p141 = scmp.eq.s32.totalorder %s42, 0
      %p142 = por %p140, %p141
      %s143 = ssub.s32 %s45, %s54
      %p144 = scmp.eq.s32.totalorder %s143, 0
      %s146 = sadd.s32 %s145, 1
      %s147 = scalar_select %p144, %s145, %s146
      %p150 = pneg %p144
      %p151 = scmp.eq.s32.totalorder %s36, 1
      %p152 = por %p150, %p151
      %p153 = scmp.ne.s32.totalorder %s145, %s148
      %p154 = scmp.eq.s32.totalorder %s36, 0
      %p155 = por %p153, %p154
      %p156 = scmp.ne.s32.totalorder %s145, %s148
      %p157 = scmp.eq.s32.totalorder %s41, 1
      %p158 = por %p156, %p157
      %p159 = scmp.ne.s32.totalorder %s148, %s149
      %p160 = scmp.eq.s32.totalorder %s41, 0
      %p161 = por %p159, %p160
      %p162 = scmp.ne.s32.totalorder %s148, %s149
      %p163 = scmp.eq.s32.totalorder %s42, 1
      %p164 = por %p162, %p163
      %p166 = scmp.ne.s32.totalorder %s149, %s165
      %p167 = scmp.eq.s32.totalorder %s42, 0
      %p168 = por %p166, %p167
      %s169 = ssub.s32 %s45, %s54
      %p170 = scmp.eq.s32.totalorder %s169, 0
      %s172 = sadd.s32 %s171, 1
      %s173 = scalar_select %p170, %s171, %s172
      %p176 = pneg %p170
      %p177 = scmp.eq.s32.totalorder %s36, 1
      %p178 = por %p176, %p177
      %p179 = scmp.ne.s32.totalorder %s171, %s174
      %p180 = scmp.eq.s32.totalorder %s36, 0
      %p181 = por %p179, %p180
      %p182 = scmp.ne.s32.totalorder %s171, %s174
      %p183 = scmp.eq.s32.totalorder %s41, 1
      %p184 = por %p182, %p183
      %p185 = scmp.ne.s32.totalorder %s174, %s175
      %p186 = scmp.eq.s32.totalorder %s41, 0
      %p187 = por %p185, %p186
      %p188 = scmp.ne.s32.totalorder %s174, %s175
      %p189 = scmp.eq.s32.totalorder %s42, 1
      %p190 = por %p188, %p189
      %p192 = scmp.ne.s32.totalorder %s175, %s191
      %p193 = scmp.eq.s32.totalorder %s42, 0
      %p194 = por %p192, %p193
      %s195 = ssub.s32 %s45, %s54
      %p196 = scmp.eq.s32.totalorder %s195, 0
      %s198 = sadd.s32 %s197, 1
      %s199 = scalar_select %p196, %s197, %s198
      %p202 = pneg %p196
      %p203 = scmp.eq.s32.totalorder %s36, 1
      %p204 = por %p202, %p203
      %p205 = scmp.ne.s32.totalorder %s197, %s200
      %p206 = scmp.eq.s32.totalorder %s36, 0
      %p207 = por %p205, %p206
      %p208 = scmp.ne.s32.totalorder %s197, %s200
      %p209 = scmp.eq.s32.totalorder %s41, 1
      %p210 = por %p208, %p209
      %p211 = scmp.ne.s32.totalorder %s200, %s201
      %p212 = scmp.eq.s32.totalorder %s41, 0
      %p213 = por %p211, %p212
      %p214 = scmp.ne.s32.totalorder %s200, %s201
      %p215 = scmp.eq.s32.totalorder %s42, 1
      %p216 = por %p214, %p215
      %p218 = scmp.ne.s32.totalorder %s201, %s217
      %p219 = scmp.eq.s32.totalorder %s42, 0
      %p220 = por %p218, %p219
      %s221 = ssub.s32 %s45, %s54
      %p222 = scmp.eq.s32.totalorder %s221, 0
      %s224 = sadd.s32 %s223, 1
      %s225 = scalar_select %p222, %s223, %s224
      %p228 = pneg %p222
      %p229 = scmp.eq.s32.totalorder %s36, 1
      %p230 = por %p228, %p229
      %p231 = scmp.ne.s32.totalorder %s223, %s226
      %p232 = scmp.eq.s32.totalorder %s36, 0
      %p233 = por %p231, %p232
      %p234 = scmp.ne.s32.totalorder %s223, %s226
      %p235 = scmp.eq.s32.totalorder %s41, 1
      %p236 = por %p234, %p235
      %p237 = scmp.ne.s32.totalorder %s226, %s227
      %p238 = scmp.eq.s32.totalorder %s41, 0
      %p239 = por %p237, %p238
      %p240 = scmp.ne.s32.totalorder %s226, %s227
      %p241 = scmp.eq.s32.totalorder %s42, 1
      %p242 = por %p240, %p241
      %p244 = scmp.ne.s32.totalorder %s227, %s243
      %p245 = scmp.eq.s32.totalorder %s42, 0
      %p246 = por %p244, %p245
      %s247 = ssub.s32 %s45, %s54
      %p248 = scmp.eq.s32.totalorder %s247, 0
      %s250 = sadd.s32 %s249, 1
      %s251 = scalar_select %p248, %s249, %s250
      %p254 = pneg %p248
      %p255 = scmp.eq.s32.totalorder %s36, 1
      %p256 = por %p254, %p255
      %p257 = scmp.ne.s32.totalorder %s249, %s252
      %p258 = scmp.eq.s32.totalorder %s36, 0
      %p259 = por %p257, %p258
      %p260 = scmp.ne.s32.totalorder %s249, %s252
      %p261 = scmp.eq.s32.totalorder %s41, 1
      %p262 = por %p260, %p261
      %p263 = scmp.ne.s32.totalorder %s252, %s253
      %p264 = scmp.eq.s32.totalorder %s41, 0
      %p265 = por %p263, %p264
      %p266 = scmp.ne.s32.totalorder %s252, %s253
      %p267 = scmp.eq.s32.totalorder %s42, 1
      %p268 = por %p266, %p267
      %p270 = scmp.ne.s32.totalorder %s253, %s269
      %p271 = scmp.eq.s32.totalorder %s42, 0
      %p272 = por %p270, %p271
      %s273 = ssub.s32 %s45, %s54
      %p274 = scmp.eq.s32.totalorder %s273, 0
      %s276 = sadd.s32 %s275, 1
      %s277 = scalar_select %p274, %s275, %s276
      %p280 = pneg %p274
      %p281 = scmp.eq.s32.totalorder %s36, 1
      %p282 = por %p280, %p281
      %p283 = scmp.ne.s32.totalorder %s275, %s278
      %p284 = scmp.eq.s32.totalorder %s36, 0
      %p285 = por %p283, %p284
      %p286 = scmp.ne.s32.totalorder %s275, %s278
      %p287 = scmp.eq.s32.totalorder %s41, 1
      %p288 = por %p286, %p287
      %p289 = scmp.ne.s32.totalorder %s278, %s279
      %p290 = scmp.eq.s32.totalorder %s41, 0
      %p291 = por %p289, %p290
      %p292 = scmp.ne.s32.totalorder %s278, %s279
      %p293 = scmp.eq.s32.totalorder %s42, 1
      %p294 = por %p292, %p293
      %p296 = scmp.ne.s32.totalorder %s279, %s295
      %p297 = scmp.eq.s32.totalorder %s42, 0
      %p298 = por %p296, %p297
      %s299 = ssub.s32 %s45, %s54
      %p300 = scmp.eq.s32.totalorder %s299, 0
      %s302 = sadd.s32 %s301, 1
      %s303 = scalar_select %p300, %s301, %s302
      %p306 = pneg %p300
      %p307 = scmp.eq.s32.totalorder %s36, 1
      %p308 = por %p306, %p307
      %p309 = scmp.ne.s32.totalorder %s301, %s304
      %p310 = scmp.eq.s32.totalorder %s36, 0
      %p311 = por %p309, %p310
      %p312 = scmp.ne.s32.totalorder %s301, %s304
      %p313 = scmp.eq.s32.totalorder %s41, 1
      %p314 = por %p312, %p313
      %p315 = scmp.ne.s32.totalorder %s304, %s305
      %p316 = scmp.eq.s32.totalorder %s41, 0
      %p317 = por %p315, %p316
      %p318 = scmp.ne.s32.totalorder %s304, %s305
      %p319 = scmp.eq.s32.totalorder %s42, 1
      %p320 = por %p318, %p319
      %p322 = scmp.ne.s32.totalorder %s305, %s321
      %p323 = scmp.eq.s32.totalorder %s42, 0
      %p324 = por %p322, %p323
      %s326 = sadd.s32 %s325, 1
      %p329 = scmp.eq.s32.totalorder %s36, 1
      %p330 = scmp.ne.s32.totalorder %s325, %s327
      %p331 = scmp.eq.s32.totalorder %s36, 0
      %p332 = por %p330, %p331
      %p333 = scmp.ne.s32.totalorder %s325, %s327
      %p334 = scmp.eq.s32.totalorder %s41, 1
      %p335 = por %p333, %p334
      %p336 = scmp.ne.s32.totalorder %s327, %s328
      %p337 = scmp.eq.s32.totalorder %s41, 0
      %p338 = por %p336, %p337
      %p339 = scmp.ne.s32.totalorder %s327, %s328
      %p340 = scmp.eq.s32.totalorder %s42, 1
      %p341 = por %p339, %p340
      %p343 = scmp.ne.s32.totalorder %s328, %s342
      %p344 = scmp.eq.s32.totalorder %s42, 0
      %p345 = por %p343, %p344
      %s346 = ssub.s32 %s44, %s58
      %p347 = scmp.eq.s32.totalorder %s346, 0
      %s349 = sadd.s32 %s348, 1
      %s350 = scalar_select %p347, %s348, %s349
      %p353 = pneg %p347
      %p354 = scmp.eq.s32.totalorder %s36, 1
      %p355 = por %p353, %p354
      %p356 = scmp.ne.s32.totalorder %s348, %s351
      %p357 = scmp.eq.s32.totalorder %s36, 0
      %p358 = por %p356, %p357
      %p359 = scmp.ne.s32.totalorder %s348, %s351
      %p360 = scmp.eq.s32.totalorder %s41, 1
      %p361 = por %p359, %p360
      %p362 = scmp.ne.s32.totalorder %s351, %s352
      %p363 = scmp.eq.s32.totalorder %s41, 0
      %p364 = por %p362, %p363
      %p365 = scmp.ne.s32.totalorder %s351, %s352
      %p366 = scmp.eq.s32.totalorder %s42, 1
      %p367 = por %p365, %p366
      %p369 = scmp.ne.s32.totalorder %s352, %s368
      %p370 = scmp.eq.s32.totalorder %s42, 0
      %p371 = por %p369, %p370
      %s372 = ssub.s32 %s43, %s62
      %p373 = scmp.eq.s32.totalorder %s372, 0
      %s375 = sadd.s32 %s374, 1
      %s376 = scalar_select %p373, %s374, %s375
      %p379 = pneg %p373
      %p380 = scmp.eq.s32.totalorder %s36, 1
      %p381 = por %p379, %p380
      %p382 = scmp.ne.s32.totalorder %s374, %s377
      %p383 = scmp.eq.s32.totalorder %s36, 0
      %p384 = por %p382, %p383
      %p385 = scmp.ne.s32.totalorder %s374, %s377
      %p386 = scmp.eq.s32.totalorder %s41, 1
      %p387 = por %p385, %p386
      %p388 = scmp.ne.s32.totalorder %s377, %s378
      %p389 = scmp.eq.s32.totalorder %s41, 0
      %p390 = por %p388, %p389
      %p391 = scmp.ne.s32.totalorder %s377, %s378
      %p392 = scmp.eq.s32.totalorder %s42, 1
      %p393 = por %p391, %p392
      %p395 = scmp.ne.s32.totalorder %s378, %s394
      %p396 = scmp.eq.s32.totalorder %s42, 0
      %p397 = por %p395, %p396
      %s398 = ssub.s32 %s43, %s62
      %s399 = ssub.s32 %s44, %s58
      %s400 = sor.u32 %s398, %s399
      %p401 = scmp.eq.s32.totalorder %s400, 0
      %s403 = sadd.s32 %s402, 1
      %s404 = scalar_select %p401, %s402, %s403
      %p407 = pneg %p401
      %p408 = scmp.eq.s32.totalorder %s36, 1
      %p409 = por %p407, %p408
      %p410 = scmp.ne.s32.totalorder %s402, %s405
      %p411 = scmp.eq.s32.totalorder %s36, 0
      %p412 = por %p410, %p411
      %p413 = scmp.ne.s32.totalorder %s402, %s405
      %p414 = scmp.eq.s32.totalorder %s41, 1
      %p415 = por %p413, %p414
      %p416 = scmp.ne.s32.totalorder %s405, %s406
      %p417 = scmp.eq.s32.totalorder %s41, 0
      %p418 = por %p416, %p417
      %p419 = scmp.ne.s32.totalorder %s405, %s406
      %p420 = scmp.eq.s32.totalorder %s42, 1
      %p421 = por %p419, %p420
      %p423 = scmp.ne.s32.totalorder %s406, %s422
      %p424 = scmp.eq.s32.totalorder %s42, 0
      %p425 = por %p423, %p424
      %s426 = ssub.s32 %s43, %s62
      %s427 = ssub.s32 %s45, %s54
      %s428 = sor.u32 %s426, %s427
      %s429 = ssub.s32 %s44, %s58
      %s430 = sor.u32 %s428, %s429
      %p431 = scmp.eq.s32.totalorder %s430, 0
      %s433 = sadd.s32 %s432, 1
      %s434 = scalar_select %p431, %s432, %s433
      %p437 = pneg %p431
      %p438 = scmp.eq.s32.totalorder %s36, 1
      %p439 = por %p437, %p438
      %p440 = scmp.ne.s32.totalorder %s432, %s435
      %p441 = scmp.eq.s32.totalorder %s36, 0
      %p442 = por %p440, %p441
      %p443 = scmp.ne.s32.totalorder %s432, %s435
      %p444 = scmp.eq.s32.totalorder %s41, 1
      %p445 = por %p443, %p444
      %p446 = scmp.ne.s32.totalorder %s435, %s436
      %p447 = scmp.eq.s32.totalorder %s41, 0
      %p448 = por %p446, %p447
      %p449 = scmp.ne.s32.totalorder %s435, %s436
      %p450 = scmp.eq.s32.totalorder %s42, 1
      %p451 = por %p449, %p450
      %p453 = scmp.ne.s32.totalorder %s436, %s452
      %p454 = scmp.eq.s32.totalorder %s42, 0
      %p455 = por %p453, %p454
      %p456 = scmp.le.s32.totalorder 1, %s36
      %p457 = scmp.lt.s32.totalorder %s36, 3
      %p458 = pnand %p456, %p457
      %p459 = pneg %p458
      // Predicated region
      $region9: #{tpu_custom_call.1} parent=5 // pred_check
        _
      $region10: #{tpu_custom_call.1} parent=5 // pred_check_branch
        %461 = sbr.rel (%p458) target = $region12
      $region11: #{tpu_custom_call.1} parent=5 // pred_region
        %s462 = ssub.s32 %s36, 1
        // Predicated region
        $region13: #{tpu_custom_call.1} parent=11 // pred_check
          %p463 = pneg %p161
        $region14: #{tpu_custom_call.1} parent=11 // pred_check_branch
          %465 = sbr.rel (%p463) target = $region16
        $region15: #{tpu_custom_call.1} parent=11 // pred_region
          %s467 = ssub.s32 256, 256
          %468 = vsyncadd [#allocation10], %s467
          %s469 = smul.addr %s48, 4
          %s470 = smul.addr %s469, 64
          %s471 = scalar_lea.hbm %s3, %s470
          %s472 = sshll.u32 [#allocation9], 4
          %s473 = int_to_ptr.vmem [resolvable:$true] %s472
          %478 = dma.hbm_to_vmem [thread:$0]  %s471, 256, %s473, [#allocation10], 64, 64, 4
        $region16: #{tpu_custom_call.1} parent=11 // pred_fallthru
          _
        // Predicated region
        $region17: #{tpu_custom_call.1} parent=11 // pred_check
          %p479 = pneg %p187
        $region18: #{tpu_custom_call.1} parent=11 // pred_check_branch
          %481 = sbr.rel (%p479) target = $region20
        $region19: #{tpu_custom_call.1} parent=11 // pred_region
          %p482 = scmp.lt.s32.totalorder %s48, 0
          %s483 = scalar_select %p482, %s48, 0
          %s484 = scalar_lea.vmem %s4, %s483
        $region20: #{tpu_custom_call.1} parent=11 // pred_fallthru
          _
        // Predicated region
        $region21: #{tpu_custom_call.1} parent=11 // pred_check
          %p485 = pneg %p213
        $region22: #{tpu_custom_call.1} parent=11 // pred_check_branch
          %487 = sbr.rel (%p485) target = $region24
        $region23: #{tpu_custom_call.1} parent=11 // pred_region
          %p488 = scmp.lt.s32.totalorder %s48, 0
          %s489 = scalar_select %p488, %s48, 0
          %s490 = smul.addr %s489, 4
          %s491 = smul.addr %s490, 4
          %s492 = scalar_lea.vmem %s5, %s491
        $region24: #{tpu_custom_call.1} parent=11 // pred_fallthru
          _
        // Predicated region
        $region25: #{tpu_custom_call.1} parent=11 // pred_check
          %p493 = pneg %p239
        $region26: #{tpu_custom_call.1} parent=11 // pred_check_branch
          %495 = sbr.rel (%p493) target = $region28
        $region27: #{tpu_custom_call.1} parent=11 // pred_region
          %s497 = ssub.s32 16, 16
          %498 = vsyncadd [#allocation10], %s497
          %s499 = smul.addr %s48, 16
          %s500 = scalar_lea.hbm %s6, %s499
          %s502 = sshll.u32 [#allocation11], 4
          %s503 = int_to_ptr.vmem [resolvable:$true] %s502
          %505 = dma.hbm_to_vmem [thread:$0]  %s500, 16, %s503, [#allocation10]
        $region28: #{tpu_custom_call.1} parent=11 // pred_fallthru
          _
        // Predicated region
        $region29: #{tpu_custom_call.1} parent=11 // pred_check
          %p506 = pneg %p265
        $region30: #{tpu_custom_call.1} parent=11 // pred_check_branch
          %508 = sbr.rel (%p506) target = $region32
        $region31: #{tpu_custom_call.1} parent=11 // pred_region
          %s510 = ssub.s32 256, 256
          %511 = vsyncadd [#allocation13], %s510
          %s512 = smul.addr %s48, 4
          %s513 = smul.addr %s512, 64
          %s514 = scalar_lea.hbm %s7, %s513
          %s515 = sshll.u32 [#allocation12], 4
          %s516 = int_to_ptr.vmem [resolvable:$true] %s515
          %521 = dma.hbm_to_vmem [thread:$0]  %s514, 256, %s516, [#allocation13], 64, 64, 4
        $region32: #{tpu_custom_call.1} parent=11 // pred_fallthru
          _
        // Predicated region
        $region33: #{tpu_custom_call.1} parent=11 // pred_check
          %p522 = pneg %p291
        $region34: #{tpu_custom_call.1} parent=11 // pred_check_branch
          %524 = sbr.rel (%p522) target = $region36
        $region35: #{tpu_custom_call.1} parent=11 // pred_region
          %s526 = ssub.s32 16, 16
          %527 = vsyncadd [#allocation13], %s526
          %s528 = smul.addr %s48, 16
          %s529 = scalar_lea.hbm %s8, %s528
          %s531 = sshll.u32 [#allocation14], 4
          %s532 = int_to_ptr.vmem [resolvable:$true] %s531
          %534 = dma.hbm_to_vmem [thread:$0]  %s529, 16, %s532, [#allocation13]
        $region36: #{tpu_custom_call.1} parent=11 // pred_fallthru
          _
        // Predicated region
        $region37: #{tpu_custom_call.1} parent=11 // pred_check
          %p535 = pneg %p317
        $region38: #{tpu_custom_call.1} parent=11 // pred_check_branch
          %537 = sbr.rel (%p535) target = $region40
        $region39: #{tpu_custom_call.1} parent=11 // pred_region
          %p538 = scmp.lt.s32.totalorder %s48, 0
          %s539 = scalar_select %p538, %s48, 0
          %s540 = smul.addr %s539, 4
          %s541 = smul.addr %s540, 4
          %s542 = scalar_lea.vmem %s9, %s541
        $region40: #{tpu_custom_call.1} parent=11 // pred_fallthru
          _
        // Predicated region
        $region41: #{tpu_custom_call.1} parent=11 // pred_check
          %p543 = pneg %p338
        $region42: #{tpu_custom_call.1} parent=11 // pred_check_branch
          %545 = sbr.rel (%p543) target = $region44
        $region43: #{tpu_custom_call.1} parent=11 // pred_region
          %s547 = ssub.s32 16, 16
          %548 = vsyncadd [#allocation16], %s547
          %s550 = sshll.u32 [#allocation15], 4
          %s551 = int_to_ptr.vmem [resolvable:$true] %s550
          %553 = dma.hbm_to_vmem [thread:$0]  %s10, 16, %s551, [#allocation16]
        $region44: #{tpu_custom_call.1} parent=11 // pred_fallthru
          _
        // Predicated region
        $region45: #{tpu_custom_call.1} parent=11 // pred_check
          %p554 = pneg %p364
        $region46: #{tpu_custom_call.1} parent=11 // pred_check_branch
          %556 = sbr.rel (%p554) target = $region48
        $region47: #{tpu_custom_call.1} parent=11 // pred_region
          %p557 = scmp.lt.s32.totalorder %s47, 0
          %s558 = scalar_select %p557, %s47, 0
          %s559 = smul.addr %s558, 8
          %s560 = scalar_lea.vmem %s11, %s559
        $region48: #{tpu_custom_call.1} parent=11 // pred_fallthru
          _
      $region12: #{tpu_custom_call.1} parent=5 // pred_fallthru
        _
      %p561 = scmp.lt.s32.totalorder %s36, 2
      // Predicated region
      $region49: #{tpu_custom_call.1} parent=5 // pred_check
        %p562 = pneg %p561
      $region50: #{tpu_custom_call.1} parent=5 // pred_check_branch
        %564 = sbr.rel (%p562) target = $region52
      $region51: #{tpu_custom_call.1} parent=5 // pred_region
        // Predicated region
        $region53: #{tpu_custom_call.1} parent=51 // pred_check
          %p565 = pneg %p77
        $region54: #{tpu_custom_call.1} parent=51 // pred_check_branch
          %567 = sbr.rel (%p565) target = $region56
        $region55: #{tpu_custom_call.1} parent=51 // pred_region
          %s568 = sand.u32 %s67, 1
          %s569 = scalar_lea.sflag [#allocation4], %s568
          %s570 = sand.u32 %s67, 1
          %s571 = smul.addr %s570, 8
          %s572 = scalar_lea.vmem [#allocation3], %s571
          %s574 = ssub.s32 128, 128
          %575 = vsyncadd %s569, %s574
          %s576 = sadd.s32 %s44, %s43
          %s577 = smul.addr %s576, 128
          %s578 = scalar_lea.hbm %s0, %s577
          %s580 = sshll.u32 %s572, 4
          %s581 = int_to_ptr.vmem [resolvable:$true] %s580
          %583 = dma.hbm_to_vmem [thread:$0]  %s578, 128, %s581, %s569
        $region56: #{tpu_custom_call.1} parent=51 // pred_fallthru
          _
        // Predicated region
        $region57: #{tpu_custom_call.1} parent=51 // pred_check
          %p584 = pneg %p103
        $region58: #{tpu_custom_call.1} parent=51 // pred_check_branch
          %586 = sbr.rel (%p584) target = $region60
        $region59: #{tpu_custom_call.1} parent=51 // pred_region
          %s587 = sand.u32 %s36, 1
          %s588 = scalar_lea.sflag [#allocation7], %s587
          %s589 = sand.u32 %s93, 1
          %s590 = smul.addr %s589, 8
          %s591 = scalar_lea.vmem [#allocation6], %s590
          %s593 = ssub.s32 128, 128
          %594 = vsyncadd %s588, %s593
          %s595 = smul.addr %s43, 128
          %s596 = scalar_lea.hbm %s1, %s595
          %s598 = sshll.u32 %s591, 4
          %s599 = int_to_ptr.vmem [resolvable:$true] %s598
          %601 = dma.hbm_to_vmem [thread:$0]  %s596, 128, %s599, %s588
        $region60: #{tpu_custom_call.1} parent=51 // pred_fallthru
          _
        // Predicated region
        $region61: #{tpu_custom_call.1} parent=51 // pred_check
          %p602 = pneg %p129
        $region62: #{tpu_custom_call.1} parent=51 // pred_check_branch
          %604 = sbr.rel (%p602) target = $region64
        $region63: #{tpu_custom_call.1} parent=51 // pred_region
          %s605 = sand.u32 %s36, 1
          %s606 = scalar_lea.sflag [#allocation7], %s605
          %s607 = sand.u32 %s119, 1
          %s608 = smul.addr %s607, 8
          %s609 = scalar_lea.vmem [#allocation8], %s608
          %s611 = ssub.s32 128, 128
          %612 = vsyncadd %s606, %s611
          %s613 = smul.addr %s43, 128
          %s614 = scalar_lea.hbm %s2, %s613
          %s616 = sshll.u32 %s609, 4
          %s617 = int_to_ptr.vmem [resolvable:$true] %s616
          %619 = dma.hbm_to_vmem [thread:$0]  %s614, 128, %s617, %s606
        $region64: #{tpu_custom_call.1} parent=51 // pred_fallthru
          _
        // Predicated region
        $region65: #{tpu_custom_call.1} parent=51 // pred_check
          %p620 = pneg %p384
        $region66: #{tpu_custom_call.1} parent=51 // pred_check_branch
          %622 = sbr.rel (%p620) target = $region68
        $region67: #{tpu_custom_call.1} parent=51 // pred_region
          %p623 = scmp.lt.s32.totalorder %s43, 1
          %s624 = scalar_select %p623, %s43, 1
          %s625 = scalar_lea.vmem %s12, %s624
        $region68: #{tpu_custom_call.1} parent=51 // pred_fallthru
          _
      $region52: #{tpu_custom_call.1} parent=5 // pred_fallthru
        _
      %p626 = scmp.le.s32.totalorder 1, %s36
      %p627 = scmp.lt.s32.totalorder %s36, 3
      %p628 = pnand %p626, %p627
      %p629 = pneg %p628
      // Predicated region
      $region69: #{tpu_custom_call.1} parent=5 // pred_check
        _
      $region70: #{tpu_custom_call.1} parent=5 // pred_check_branch
        %631 = sbr.rel (%p628) target = $region72
      $region71: #{tpu_custom_call.1} parent=5 // pred_region
        %s632 = ssub.s32 %s36, 1
        %s633 = sand.u32 %s70, 1
        %s634 = scalar_lea.sflag [#allocation4], %s633
        %s635 = sand.u32 %s70, 1
        %s636 = smul.addr %s635, 8
        %s637 = scalar_lea.vmem [#allocation3], %s636
        // Predicated region
        $region73: #{tpu_custom_call.1} parent=71 // pred_check
          %p638 = pneg %p83
        $region74: #{tpu_custom_call.1} parent=71 // pred_check_branch
          %640 = sbr.rel (%p638) target = $region76
        $region75: #{tpu_custom_call.1} parent=71 // pred_region
          %641 = dma.done %s634, 128
        $region76: #{tpu_custom_call.1} parent=71 // pred_fallthru
          _
        %s642 = sand.u32 %s41, 1
        %s643 = scalar_lea.sflag [#allocation7], %s642
        %s644 = sand.u32 %s96, 1
        %s645 = smul.addr %s644, 8
        %s646 = scalar_lea.vmem [#allocation6], %s645
        // Predicated region
        $region77: #{tpu_custom_call.1} parent=71 // pred_check
          %p647 = pneg %p109
        $region78: #{tpu_custom_call.1} parent=71 // pred_check_branch
          %649 = sbr.rel (%p647) target = $region80
        $region79: #{tpu_custom_call.1} parent=71 // pred_region
          %650 = dma.done %s643, 128
        $region80: #{tpu_custom_call.1} parent=71 // pred_fallthru
          _
        %s651 = sand.u32 %s41, 1
        %s652 = scalar_lea.sflag [#allocation7], %s651
        %s653 = sand.u32 %s122, 1
        %s654 = smul.addr %s653, 8
        %s655 = scalar_lea.vmem [#allocation8], %s654
        // Predicated region
        $region81: #{tpu_custom_call.1} parent=71 // pred_check
          %p656 = pneg %p135
        $region82: #{tpu_custom_call.1} parent=71 // pred_check_branch
          %658 = sbr.rel (%p656) target = $region84
        $region83: #{tpu_custom_call.1} parent=71 // pred_region
          %659 = dma.done %s652, 128
        $region84: #{tpu_custom_call.1} parent=71 // pred_fallthru
          _
        // Predicated region
        $region85: #{tpu_custom_call.1} parent=71 // pred_check
          %p660 = pneg %p161
        $region86: #{tpu_custom_call.1} parent=71 // pred_check_branch
          %662 = sbr.rel (%p660) target = $region88
        $region87: #{tpu_custom_call.1} parent=71 // pred_region
          %663 = dma.done [#allocation10], 256
        $region88: #{tpu_custom_call.1} parent=71 // pred_fallthru
          _
        // Predicated region
        $region89: #{tpu_custom_call.1} parent=71 // pred_check
          %p664 = pneg %p239
        $region90: #{tpu_custom_call.1} parent=71 // pred_check_branch
          %666 = sbr.rel (%p664) target = $region92
        $region91: #{tpu_custom_call.1} parent=71 // pred_region
          %667 = dma.done [#allocation10], 16
        $region92: #{tpu_custom_call.1} parent=71 // pred_fallthru
          _
        // Predicated region
        $region93: #{tpu_custom_call.1} parent=71 // pred_check
          %p668 = pneg %p265
        $region94: #{tpu_custom_call.1} parent=71 // pred_check_branch
          %670 = sbr.rel (%p668) target = $region96
        $region95: #{tpu_custom_call.1} parent=71 // pred_region
          %671 = dma.done [#allocation13], 256
        $region96: #{tpu_custom_call.1} parent=71 // pred_fallthru
          _
        // Predicated region
        $region97: #{tpu_custom_call.1} parent=71 // pred_check
          %p672 = pneg %p291
        $region98: #{tpu_custom_call.1} parent=71 // pred_check_branch
          %674 = sbr.rel (%p672) target = $region100
        $region99: #{tpu_custom_call.1} parent=71 // pred_region
          %675 = dma.done [#allocation13], 16
        $region100: #{tpu_custom_call.1} parent=71 // pred_fallthru
          _
        // Predicated region
        $region101: #{tpu_custom_call.1} parent=71 // pred_check
          %p676 = pneg %p338
        $region102: #{tpu_custom_call.1} parent=71 // pred_check_branch
          %678 = sbr.rel (%p676) target = $region104
        $region103: #{tpu_custom_call.1} parent=71 // pred_region
          %679 = dma.done [#allocation16], 16
        $region104: #{tpu_custom_call.1} parent=71 // pred_fallthru
          _
        %s680 = sand.u32 %s70, 1
        %s681 = scalar_lea.sflag [#allocation4], %s680
        %s682 = sand.u32 %s70, 1
        %s683 = smul.addr %s682, 8
        %s684 = scalar_lea.vmem [#allocation3], %s683
        %p685 = pneg %p83
        %p686 = pneg %p80
        %s687 = sand.u32 %s41, 1
        %s688 = scalar_lea.sflag [#allocation7], %s687
        %s689 = sand.u32 %s96, 1
        %s690 = smul.addr %s689, 8
        %s691 = scalar_lea.vmem [#allocation6], %s690
        %p692 = pneg %p109
        %p693 = pneg %p106
        %s694 = sand.u32 %s41, 1
        %s695 = scalar_lea.sflag [#allocation7], %s694
        %s696 = sand.u32 %s122, 1
        %s697 = smul.addr %s696, 8
        %s698 = scalar_lea.vmem [#allocation8], %s697
        %p699 = pneg %p135
        %p700 = pneg %p132
        %p701 = pneg %p161
        %p702 = pneg %p158
        %p703 = scmp.lt.s32.totalorder %s48, 0
        %s704 = scalar_select %p703, %s48, 0
        %s705 = scalar_lea.vmem %s4, %s704
        %p706 = pneg %p187
        %p707 = pneg %p184
        %p708 = scmp.lt.s32.totalorder %s48, 0
        %s709 = scalar_select %p708, %s48, 0
        %s710 = smul.addr %s709, 4
        %s711 = smul.addr %s710, 4
        %s712 = scalar_lea.vmem %s5, %s711
        %p713 = pneg %p213
        %p714 = pneg %p210
        %p715 = pneg %p239
        %p716 = pneg %p236
        %p717 = pneg %p265
        %p718 = pneg %p262
        %p719 = pneg %p291
        %p720 = pneg %p288
        %p721 = scmp.lt.s32.totalorder %s48, 0
        %s722 = scalar_select %p721, %s48, 0
        %s723 = smul.addr %s722, 4
        %s724 = smul.addr %s723, 4
        %s725 = scalar_lea.vmem %s9, %s724
        %p726 = pneg %p317
        %p727 = pneg %p314
        %p728 = pneg %p338
        %p729 = pneg %p335
        %p730 = scmp.lt.s32.totalorder %s47, 0
        %s731 = scalar_select %p730, %s47, 0
        %s732 = smul.addr %s731, 8
        %s733 = scalar_lea.vmem %s11, %s732
        %p734 = pneg %p364
        %p735 = pneg %p361
        %p736 = scmp.lt.s32.totalorder %s46, 1
        %s737 = scalar_select %p736, %s46, 1
        %s738 = scalar_lea.vmem %s12, %s737
        %p739 = pneg %p390
        %p740 = pneg %p387
        %p741 = pneg %p418
        %p742 = pneg %p415
        %s743 = sand.u32 %s405, 1
        %s744 = scalar_lea.sflag [#allocation5], %s743
        %s745 = sand.u32 %s405, 1
        %s746 = smul.addr %s745, 8
        %s747 = scalar_lea.vmem [#allocation17], %s746
        %p748 = pneg %p448
        %p749 = pneg %p445
        %s750 = sand.u32 %s435, 1
        %s751 = scalar_lea.sflag [#allocation19], %s750
        %s752 = sand.u32 %s435, 1
        %s753 = smul.addr %s752, 16
        %s754 = scalar_lea.vmem [#allocation18], %s753
        %p755 = scmp.lt.s32.totalorder %s48, 0
        %s756 = scalar_select %p755, %s48, 0
        %s757 = scalar_lea.vmem %s4, %s756
        %p758 = scmp.lt.s32.totalorder %s48, 0
        %s759 = scalar_select %p758, %s48, 0
        %s760 = smul.addr %s759, 4
        %s761 = smul.addr %s760, 4
        %s762 = scalar_lea.vmem %s5, %s761
        %p763 = scmp.lt.s32.totalorder %s48, 0
        %s764 = scalar_select %p763, %s48, 0
        %s765 = smul.addr %s764, 4
        %s766 = smul.addr %s765, 4
        %s767 = scalar_lea.vmem %s9, %s766
        %p768 = scmp.lt.s32.totalorder %s47, 0
        %s769 = scalar_select %p768, %s47, 0
        %s770 = smul.addr %s769, 8
        %s771 = scalar_lea.vmem %s11, %s770
        %p772 = scmp.lt.s32.totalorder %s46, 1
        %s773 = scalar_select %p772, %s46, 1
        %s774 = scalar_lea.vmem %s12, %s773
        %s775 = smul.u32 4, %s48
        %v777 = vld [vmem:[%s637] sm:$0xff]
        %v778 = vpack.c.bf16 %v777, %v777
        %v779 = vld [vmem:[%s646] sm:$0xff]
        %v780 = vpack.c.bf16 %v779, %v779
        %v781 = vld [vmem:[%s655] sm:$0xff]
        %v782 = vpack.c.bf16 %v781, %v781
        %v783 = vld [vmem:[#allocation9] sm:$0xf]
        %v784 = vld [vmem:[#allocation9 + $0x4] sm:$0xf]
        %v785 = vld [vmem:[#allocation9 + $0x8] sm:$0xf]
        %v786 = vld [vmem:[#allocation9 + $0xc] sm:$0xf]
        %v787 = vld [vmem:[%s762] sm:$0xf]
        %v788 = vld [vmem:[%s762 + $0x4] sm:$0xf]
        %v789 = vld [vmem:[%s762 + $0x8] sm:$0xf]
        %v790 = vld [vmem:[%s762 + $0xc] sm:$0xf]
        %v791 = vld [vmem:[#allocation12] sm:$0xf]
        %v792 = vld [vmem:[#allocation12 + $0x4] sm:$0xf]
        %v793 = vld [vmem:[#allocation12 + $0x8] sm:$0xf]
        %v794 = vld [vmem:[#allocation12 + $0xc] sm:$0xf]
        %v795 = vld [vmem:[%s767] sm:$0xf]
        %v796 = vld [vmem:[%s767 + $0x4] sm:$0xf]
        %v797 = vld [vmem:[%s767 + $0x8] sm:$0xf]
        %v798 = vld [vmem:[%s767 + $0xc] sm:$0xf]
        %v799 = vld [vmem:[%s757] sm:$0x1]
        %v800 = vunpack.c.l.bf16 %v799
        %v801 = vlaneseq
        %v802 = vshrl.u32 %v801, 7
        %v803 = vsub.s32 0, %v802
        %v804 = vrot.slane %v800, %v803
        %v809 = vunpack.c.l.b16 %v783
        %v810 = vunpack.c.l.b16 %v784
        %v811 = vunpack.c.l.b16 %v785
        %v812 = vunpack.c.l.b16 %v786
        %v813 = vpack.c.b16 %v810, %v809
        %v814 = vpack.c.b16 %v812, %v811
        %vm817 = vcmask 261120
        %v819 = vsel %vm817, %v778, 0
        %821 = vmatprep.subr.bf16.mxu0 0
        %822 = vmatpush1.bf16.msra.mxu0 %v813
        %823 = vmatprep.subr.bf16.mxu0 0
        %824 = vmatpush1.bf16.msra.mxu0 %v814
        %825 = vmatprep.subr.bf16.mxu0 0
        %826 = vmatpush1.bf16.msra.mxu0 0
        %827 = vmatprep.subr.bf16.mxu0 0
        %828 = vmatpush1.bf16.msra.mxu0 0
        %829 = vmatprep.subr.bf16.mxu0 0
        %830 = vmatpush1.bf16.msra.mxu0 0
        %831 = vmatprep.subr.bf16.mxu0 0
        %832 = vmatpush1.bf16.msra.mxu0 0
        %833 = vmatprep.subr.bf16.mxu0 0
        %834 = vmatpush1.bf16.msra.mxu0 0
        %835 = vmatprep.subr.bf16.mxu0 0
        %836 = vmatpush1.bf16.msra.mxu0 0
        %837 = vmatprep.subr.bf16.mxu0 0
        %838 = vmatpush1.bf16.msra.mxu0 0
        %839 = vmatprep.subr.bf16.mxu0 0
        %840 = vmatpush1.bf16.msra.mxu0 0
        %841 = vmatprep.subr.bf16.mxu0 0
        %842 = vmatpush1.bf16.msra.mxu0 0
        %843 = vmatprep.subr.bf16.mxu0 0
        %844 = vmatpush1.bf16.msra.mxu0 0
        %845 = vmatprep.subr.bf16.mxu0 0
        %846 = vmatpush1.bf16.msra.mxu0 0
        %847 = vmatprep.subr.bf16.mxu0 0
        %848 = vmatpush1.bf16.msra.mxu0 0
        %849 = vmatprep.subr.bf16.mxu0 0
        %850 = vmatpush1.bf16.msra.mxu0 0
        %851 = vmatprep.subr.bf16.mxu0 0
        %852 = vmatpush1.bf16.msra.mxu0 0
        %853 = vmatprep.mubr.bf16.mxu0 0
        %854 = vmatmul.mubr.bf16.gmra.mrb[0].mxu0 %v819
        %v855 = vpop.f32.mrb[0].mxu0
        %v856 = vadd.f32 %v804, %v855
        %v857 = vpop.f32.mrb[0].mxu0
        %v858 = vpop.f32.mrb[0].mxu0
        %v859 = vpop.f32.mrb[0].mxu0
        %860 = vdwg.mxu0
        %v861 = vmul.f32 %v856, 0.35355338
        %v862 = vld [vmem:[#allocation11] sm:$0x1]
        %v863 = vunpack.c.l.bf16 %v862
        %v864 = vlaneseq
        %v865 = vshrl.u32 %v864, 7
        %v866 = vsub.s32 0, %v865
        %v867 = vrot.slane %v863, %v866
        %v872 = vunpack.c.l.b16 %v787
        %v873 = vunpack.c.l.b16 %v788
        %v874 = vunpack.c.l.b16 %v789
        %v875 = vunpack.c.l.b16 %v790
        %v876 = vpack.c.b16 %v873, %v872
        %v877 = vpack.c.b16 %v875, %v874
        %v881 = vsel %vm817, %v780, 0
        %883 = vmatprep.subr.bf16.mxu0 0
        %884 = vmatpush1.bf16.msra.mxu0 %v876
        %885 = vmatprep.subr.bf16.mxu0 0
        %886 = vmatpush1.bf16.msra.mxu0 %v877
        %887 = vmatprep.subr.bf16.mxu0 0
        %888 = vmatpush1.bf16.msra.mxu0 0
        %889 = vmatprep.subr.bf16.mxu0 0
        %890 = vmatpush1.bf16.msra.mxu0 0
        %891 = vmatprep.subr.bf16.mxu0 0
        %892 = vmatpush1.bf16.msra.mxu0 0
        %893 = vmatprep.subr.bf16.mxu0 0
        %894 = vmatpush1.bf16.msra.mxu0 0
        %895 = vmatprep.subr.bf16.mxu0 0
        %896 = vmatpush1.bf16.msra.mxu0 0
        %897 = vmatprep.subr.bf16.mxu0 0
        %898 = vmatpush1.bf16.msra.mxu0 0
        %899 = vmatprep.subr.bf16.mxu0 0
        %900 = vmatpush1.bf16.msra.mxu0 0
        %901 = vmatprep.subr.bf16.mxu0 0
        %902 = vmatpush1.bf16.msra.mxu0 0
        %903 = vmatprep.subr.bf16.mxu0 0
        %904 = vmatpush1.bf16.msra.mxu0 0
        %905 = vmatprep.subr.bf16.mxu0 0
        %906 = vmatpush1.bf16.msra.mxu0 0
        %907 = vmatprep.subr.bf16.mxu0 0
        %908 = vmatpush1.bf16.msra.mxu0 0
        %909 = vmatprep.subr.bf16.mxu0 0
        %910 = vmatpush1.bf16.msra.mxu0 0
        %911 = vmatprep.subr.bf16.mxu0 0
        %912 = vmatpush1.bf16.msra.mxu0 0
        %913 = vmatprep.subr.bf16.mxu0 0
        %914 = vmatpush1.bf16.msra.mxu0 0
        %915 = vmatprep.mubr.bf16.mxu0 0
        %916 = vmatmul.mubr.bf16.gmra.mrb[0].mxu0 %v881
        %v917 = vpop.f32.mrb[0].mxu0
        %v918 = vadd.f32 %v867, %v917
        %v919 = vpop.f32.mrb[0].mxu0
        %v920 = vpop.f32.mrb[0].mxu0
        %v921 = vpop.f32.mrb[0].mxu0
        %922 = vdwg.mxu0
        %v923 = vld [vmem:[#allocation14] sm:$0x1]
        %v924 = vunpack.c.l.bf16 %v923
        %v925 = vlaneseq
        %v926 = vshrl.u32 %v925, 7
        %v927 = vsub.s32 0, %v926
        %v928 = vrot.slane %v924, %v927
        %v933 = vunpack.c.l.b16 %v791
        %v934 = vunpack.c.l.b16 %v792
        %v935 = vunpack.c.l.b16 %v793
        %v936 = vunpack.c.l.b16 %v794
        %v937 = vpack.c.b16 %v934, %v933
        %v938 = vpack.c.b16 %v936, %v935
        %v942 = vsel %vm817, %v782, 0
        %944 = vmatprep.subr.bf16.mxu0 0
        %945 = vmatpush1.bf16.msra.mxu0 %v937
        %946 = vmatprep.subr.bf16.mxu0 0
        %947 = vmatpush1.bf16.msra.mxu0 %v938
        %948 = vmatprep.subr.bf16.mxu0 0
        %949 = vmatpush1.bf16.msra.mxu0 0
        %950 = vmatprep.subr.bf16.mxu0 0
        %951 = vmatpush1.bf16.msra.mxu0 0
        %952 = vmatprep.subr.bf16.mxu0 0
        %953 = vmatpush1.bf16.msra.mxu0 0
        %954 = vmatprep.subr.bf16.mxu0 0
        %955 = vmatpush1.bf16.msra.mxu0 0
        %956 = vmatprep.subr.bf16.mxu0 0
        %957 = vmatpush1.bf16.msra.mxu0 0
        %958 = vmatprep.subr.bf16.mxu0 0
        %959 = vmatpush1.bf16.msra.mxu0 0
        %960 = vmatprep.subr.bf16.mxu0 0
        %961 = vmatpush1.bf16.msra.mxu0 0
        %962 = vmatprep.subr.bf16.mxu0 0
        %963 = vmatpush1.bf16.msra.mxu0 0
        %964 = vmatprep.subr.bf16.mxu0 0
        %965 = vmatpush1.bf16.msra.mxu0 0
        %966 = vmatprep.subr.bf16.mxu0 0
        %967 = vmatpush1.bf16.msra.mxu0 0
        %968 = vmatprep.subr.bf16.mxu0 0
        %969 = vmatpush1.bf16.msra.mxu0 0
        %970 = vmatprep.subr.bf16.mxu0 0
        %971 = vmatpush1.bf16.msra.mxu0 0
        %972 = vmatprep.subr.bf16.mxu0 0
        %973 = vmatpush1.bf16.msra.mxu0 0
        %974 = vmatprep.subr.bf16.mxu0 0
        %975 = vmatpush1.bf16.msra.mxu0 0
        %976 = vmatprep.mubr.bf16.mxu0 0
        %977 = vmatmul.mubr.bf16.gmra.mrb[0].mxu0 %v942
        %v978 = vpop.f32.mrb[0].mxu0
        %v979 = vadd.f32 %v928, %v978
        %v980 = vpop.f32.mrb[0].mxu0
        %v981 = vpop.f32.mrb[0].mxu0
        %v982 = vpop.f32.mrb[0].mxu0
        %983 = vdwg.mxu0
        %v984 = vld [vmem:[%s774] sm:$0x1]
        %vm985 = vcmp.ne.s32.totalorder %v984, 0
        %v986 = vsel %vm985, -1e+30, 0.0
        %v987 = vld [vmem:[%s771] sm:$0xff]
        %v989 = vlaneseq
        %v990 = vshrl.u32 %v989, 7
        %v991 = vsub.s32 0, %v990
        %v992 = vrot.slane %v986, %v991
        %v994 = vadd.f32 %v987, %v992
        %v995 = vpack.c.bf16 %v861, %v861
        %v996 = vpack.c.bf16 %v918, %v918
        %v997 = vpack.c.bf16 %v979, %v979
        %vm998 = vcmask 64512
        %v1000 = vsel %vm998, %v995, 0
        %v1003 = vsel %vm998, %v996, 0
        %1005 = vmatprep.subr.bf16.mxu0 0
        %1006 = vmatpush1.bf16.xpose.msra.mxu0 %v1003
        %1007 = vmatprep.subr.bf16.mxu0 0
        %1008 = vmatpush1.bf16.xpose.msra.mxu0 0
        %1009 = vmatprep.subr.bf16.mxu0 0
        %1010 = vmatpush1.bf16.xpose.msra.mxu0 0
        %1011 = vmatprep.subr.bf16.mxu0 0
        %1012 = vmatpush1.bf16.xpose.msra.mxu0 0
        %1013 = vmatprep.subr.bf16.mxu0 0
        %1014 = vmatpush1.bf16.xpose.msra.mxu0 0
        %1015 = vmatprep.subr.bf16.mxu0 0
        %1016 = vmatpush1.bf16.xpose.msra.mxu0 0
        %1017 = vmatprep.subr.bf16.mxu0 0
        %1018 = vmatpush1.bf16.xpose.msra.mxu0 0
        %1019 = vmatprep.subr.bf16.mxu0 0
        %1020 = vmatpush1.bf16.xpose.msra.mxu0 0
        %1021 = vmatprep.subr.bf16.mxu0 0
        %1022 = vmatpush1.bf16.xpose.msra.mxu0 0
        %1023 = vmatprep.subr.bf16.mxu0 0
        %1024 = vmatpush1.bf16.xpose.msra.mxu0 0
        %1025 = vmatprep.subr.bf16.mxu0 0
        %1026 = vmatpush1.bf16.xpose.msra.mxu0 0
        %1027 = vmatprep.subr.bf16.mxu0 0
        %1028 = vmatpush1.bf16.xpose.msra.mxu0 0
        %1029 = vmatprep.subr.bf16.mxu0 0
        %1030 = vmatpush1.bf16.xpose.msra.mxu0 0
        %1031 = vmatprep.subr.bf16.mxu0 0
        %1032 = vmatpush1.bf16.xpose.msra.mxu0 0
        %1033 = vmatprep.subr.bf16.mxu0 0
        %1034 = vmatpush1.bf16.xpose.msra.mxu0 0
        %1035 = vmatprep.subr.bf16.mxu0 0
        %1036 = vmatpush1.bf16.xpose.msra.mxu0 0
        %1037 = vmatprep.mubr.bf16.mxu0 0
        %1038 = vmatmul.mubr.bf16.gmra.mrb[0].mxu0 %v1000
        %v1039 = vpop.f32.mrb[0].mxu0
        %v1040 = vadd.f32 %v994, %v1039
        %v1041 = vpop.f32.mrb[0].mxu0
        %v1042 = vpop.f32.mrb[0].mxu0
        %v1043 = vpop.f32.mrb[0].mxu0
        %1044 = vdwg.mxu0
        %v1045 = vsel %vm998, %v1040, -inf
        %1046 = vmax.xlane.f32.xlu0 %v1045
        %v1047 = vpop.xlane.xlu0 %1046
        %v1048 = vsub.f32 %v1040, %v1047
        %v1049 = vmul.f32 %v1048, 1.442695
        %v1050 = vpow.pop %v1049
        %v1051 = vsel %vm998, %v1050, 0.0
        %1052 = vadd.xlane.f32.xlu0 %v1051
        %v1053 = vpop.xlane.xlu0 %1052
        %v1054 = vrcp.pop %v1053
        %v1055 = vmul.f32 %v1050, %v1054
        %v1056 = vpack.c.bf16 %v1055, %v1055
        %vm1057 = vcmask 60416
        %1058 = vst.msk [vmem:[%s754] sm:$0xf] %vm1057, %v1056
        %v1060 = vsel %vm998, %v1056, 0
        %vm1062 = vcmask 1043456
        %v1064 = vsel %vm1062, %v997, 0
        %1066 = vmatprep.subr.bf16.mxu0 0
        %1067 = vmatpush1.bf16.msra.mxu0 %v1064
        %1068 = vmatprep.subr.bf16.mxu0 0
        %1069 = vmatpush1.bf16.msra.mxu0 0
        %1070 = vmatprep.subr.bf16.mxu0 0
        %1071 = vmatpush1.bf16.msra.mxu0 0
        %1072 = vmatprep.subr.bf16.mxu0 0
        %1073 = vmatpush1.bf16.msra.mxu0 0
        %1074 = vmatprep.subr.bf16.mxu0 0
        %1075 = vmatpush1.bf16.msra.mxu0 0
        %1076 = vmatprep.subr.bf16.mxu0 0
        %1077 = vmatpush1.bf16.msra.mxu0 0
        %1078 = vmatprep.subr.bf16.mxu0 0
        %1079 = vmatpush1.bf16.msra.mxu0 0
        %1080 = vmatprep.subr.bf16.mxu0 0
        %1081 = vmatpush1.bf16.msra.mxu0 0
        %1082 = vmatprep.subr.bf16.mxu0 0
        %1083 = vmatpush1.bf16.msra.mxu0 0
        %1084 = vmatprep.subr.bf16.mxu0 0
        %1085 = vmatpush1.bf16.msra.mxu0 0
        %1086 = vmatprep.subr.bf16.mxu0 0
        %1087 = vmatpush1.bf16.msra.mxu0 0
        %1088 = vmatprep.subr.bf16.mxu0 0
        %1089 = vmatpush1.bf16.msra.mxu0 0
        %1090 = vmatprep.subr.bf16.mxu0 0
        %1091 = vmatpush1.bf16.msra.mxu0 0
        %1092 = vmatprep.subr.bf16.mxu0 0
        %1093 = vmatpush1.bf16.msra.mxu0 0
        %1094 = vmatprep.subr.bf16.mxu0 0
        %1095 = vmatpush1.bf16.msra.mxu0 0
        %1096 = vmatprep.subr.bf16.mxu0 0
        %1097 = vmatpush1.bf16.msra.mxu0 0
        %1098 = vmatprep.mubr.bf16.mxu0 0
        %1099 = vmatmul.mubr.bf16.gmra.mrb[0].mxu0 %v1060
        %v1100 = vpop.f32.mrb[0].mxu0
        %v1101 = vadd.f32 0.0, %v1100
        %v1102 = vpop.f32.mrb[0].mxu0
        %v1103 = vpop.f32.mrb[0].mxu0
        %v1104 = vpop.f32.mrb[0].mxu0
        %1105 = vdwg.mxu0
        %v1106 = vpack.c.bf16 %v1101, %v1101
        %1108 = vrot.lane.b32.xlu0 %v995, 120
        %v1109 = vpop.permute.xlu0 %1108
        %1111 = vrot.lane.b32.xlu0 %v996, 120
        %v1112 = vpop.permute.xlu0 %1111
        %v1114 = vsel %vm998, %v1109, 0
        %v1117 = vsel %vm998, %v1112, 0
        %1119 = vmatprep.subr.bf16.mxu0 0
        %1120 = vmatpush1.bf16.xpose.msra.mxu0 %v1117
        %1121 = vmatprep.subr.bf16.mxu0 0
        %1122 = vmatpush1.bf16.xpose.msra.mxu0 0
        %1123 = vmatprep.subr.bf16.mxu0 0
        %1124 = vmatpush1.bf16.xpose.msra.mxu0 0
        %1125 = vmatprep.subr.bf16.mxu0 0
        %1126 = vmatpush1.bf16.xpose.msra.mxu0 0
        %1127 = vmatprep.subr.bf16.mxu0 0
        %1128 = vmatpush1.bf16.xpose.msra.mxu0 0
        %1129 = vmatprep.subr.bf16.mxu0 0
        %1130 = vmatpush1.bf16.xpose.msra.mxu0 0
        %1131 = vmatprep.subr.bf16.mxu0 0
        %1132 = vmatpush1.bf16.xpose.msra.mxu0 0
        %1133 = vmatprep.subr.bf16.mxu0 0
        %1134 = vmatpush1.bf16.xpose.msra.mxu0 0
        %1135 = vmatprep.subr.bf16.mxu0 0
        %1136 = vmatpush1.bf16.xpose.msra.mxu0 0
        %1137 = vmatprep.subr.bf16.mxu0 0
        %1138 = vmatpush1.bf16.xpose.msra.mxu0 0
        %1139 = vmatprep.subr.bf16.mxu0 0
        %1140 = vmatpush1.bf16.xpose.msra.mxu0 0
        %1141 = vmatprep.subr.bf16.mxu0 0
        %1142 = vmatpush1.bf16.xpose.msra.mxu0 0
        %1143 = vmatprep.subr.bf16.mxu0 0
        %1144 = vmatpush1.bf16.xpose.msra.mxu0 0
        %1145 = vmatprep.subr.bf16.mxu0 0
        %1146 = vmatpush1.bf16.xpose.msra.mxu0 0
        %1147 = vmatprep.subr.bf16.mxu0 0
        %1148 = vmatpush1.bf16.xpose.msra.mxu0 0
        %1149 = vmatprep.subr.bf16.mxu0 0
        %1150 = vmatpush1.bf16.xpose.msra.mxu0 0
        %1151 = vmatprep.mubr.bf16.mxu0 0
        %1152 = vmatmul.mubr.bf16.gmra.mrb[0].mxu0 %v1114
        %v1153 = vpop.f32.mrb[0].mxu0
        %v1154 = vadd.f32 %v994, %v1153
        %v1155 = vpop.f32.mrb[0].mxu0
        %v1156 = vpop.f32.mrb[0].mxu0
        %v1157 = vpop.f32.mrb[0].mxu0
        %1158 = vdwg.mxu0
        %v1159 = vsel %vm998, %v1154, -inf
        %1160 = vmax.xlane.f32.xlu0 %v1159
        %v1161 = vpop.xlane.xlu0 %1160
        %v1162 = vsub.f32 %v1154, %v1161
        %v1163 = vmul.f32 %v1162, 1.442695
        %v1164 = vpow.pop %v1163
        %v1165 = vsel %vm998, %v1164, 0.0
        %1166 = vadd.xlane.f32.xlu0 %v1165
        %v1167 = vpop.xlane.xlu0 %1166
        %v1168 = vrcp.pop %v1167
        %v1169 = vmul.f32 %v1164, %v1168
        %v1170 = vpack.c.bf16 %v1169, %v1169
        %s1171 = scalar_lea.vmem %s754, 4 [#allocation18]
        %1172 = vst.msk [vmem:[%s1171] sm:$0xf] %vm1057, %v1170
        %1174 = vrot.lane.b32.xlu0 %v997, 120
        %v1175 = vpop.permute.xlu0 %1174
        %v1177 = vsel %vm998, %v1170, 0
        %v1180 = vsel %vm1062, %v1175, 0
        %1182 = vmatprep.subr.bf16.mxu0 0
        %1183 = vmatpush1.bf16.msra.mxu0 %v1180
        %1184 = vmatprep.subr.bf16.mxu0 0
        %1185 = vmatpush1.bf16.msra.mxu0 0
        %1186 = vmatprep.subr.bf16.mxu0 0
        %1187 = vmatpush1.bf16.msra.mxu0 0
        %1188 = vmatprep.subr.bf16.mxu0 0
        %1189 = vmatpush1.bf16.msra.mxu0 0
        %1190 = vmatprep.subr.bf16.mxu0 0
        %1191 = vmatpush1.bf16.msra.mxu0 0
        %1192 = vmatprep.subr.bf16.mxu0 0
        %1193 = vmatpush1.bf16.msra.mxu0 0
        %1194 = vmatprep.subr.bf16.mxu0 0
        %1195 = vmatpush1.bf16.msra.mxu0 0
        %1196 = vmatprep.subr.bf16.mxu0 0
        %1197 = vmatpush1.bf16.msra.mxu0 0
        %1198 = vmatprep.subr.bf16.mxu0 0
        %1199 = vmatpush1.bf16.msra.mxu0 0
        %1200 = vmatprep.subr.bf16.mxu0 0
        %1201 = vmatpush1.bf16.msra.mxu0 0
        %1202 = vmatprep.subr.bf16.mxu0 0
        %1203 = vmatpush1.bf16.msra.mxu0 0
        %1204 = vmatprep.subr.bf16.mxu0 0
        %1205 = vmatpush1.bf16.msra.mxu0 0
        %1206 = vmatprep.subr.bf16.mxu0 0
        %1207 = vmatpush1.bf16.msra.mxu0 0
        %1208 = vmatprep.subr.bf16.mxu0 0
        %1209 = vmatpush1.bf16.msra.mxu0 0
        %1210 = vmatprep.subr.bf16.mxu0 0
        %1211 = vmatpush1.bf16.msra.mxu0 0
        %1212 = vmatprep.subr.bf16.mxu0 0
        %1213 = vmatpush1.bf16.msra.mxu0 0
        %1214 = vmatprep.mubr.bf16.mxu0 0
        %1215 = vmatmul.mubr.bf16.gmra.mrb[0].mxu0 %v1177
        %v1216 = vpop.f32.mrb[0].mxu0
        %v1217 = vadd.f32 0.0, %v1216
        %v1218 = vpop.f32.mrb[0].mxu0
        %v1219 = vpop.f32.mrb[0].mxu0
        %v1220 = vpop.f32.mrb[0].mxu0
        %1221 = vdwg.mxu0
        %v1222 = vpack.c.bf16 %v1217, %v1217
        %1223 = vrot.lane.b32.xlu0 %v995, 112
        %v1224 = vpop.permute.xlu0 %1223
        %1225 = vrot.lane.b32.xlu0 %v996, 112
        %v1226 = vpop.permute.xlu0 %1225
        %v1228 = vsel %vm998, %v1224, 0
        %v1231 = vsel %vm998, %v1226, 0
        %1233 = vmatprep.subr.bf16.mxu0 0
        %1234 = vmatpush1.bf16.xpose.msra.mxu0 %v1231
        %1235 = vmatprep.subr.bf16.mxu0 0
        %1236 = vmatpush1.bf16.xpose.msra.mxu0 0
        %1237 = vmatprep.subr.bf16.mxu0 0
        %1238 = vmatpush1.bf16.xpose.msra.mxu0 0
        %1239 = vmatprep.subr.bf16.mxu0 0
        %1240 = vmatpush1.bf16.xpose.msra.mxu0 0
        %1241 = vmatprep.subr.bf16.mxu0 0
        %1242 = vmatpush1.bf16.xpose.msra.mxu0 0
        %1243 = vmatprep.subr.bf16.mxu0 0
        %1244 = vmatpush1.bf16.xpose.msra.mxu0 0
        %1245 = vmatprep.subr.bf16.mxu0 0
        %1246 = vmatpush1.bf16.xpose.msra.mxu0 0
        %1247 = vmatprep.subr.bf16.mxu0 0
        %1248 = vmatpush1.bf16.xpose.msra.mxu0 0
        %1249 = vmatprep.subr.bf16.mxu0 0
        %1250 = vmatpush1.bf16.xpose.msra.mxu0 0
        %1251 = vmatprep.subr.bf16.mxu0 0
        %1252 = vmatpush1.bf16.xpose.msra.mxu0 0
        %1253 = vmatprep.subr.bf16.mxu0 0
        %1254 = vmatpush1.bf16.xpose.msra.mxu0 0
        %1255 = vmatprep.subr.bf16.mxu0 0
        %1256 = vmatpush1.bf16.xpose.msra.mxu0 0
        %1257 = vmatprep.subr.bf16.mxu0 0
        %1258 = vmatpush1.bf16.xpose.msra.mxu0 0
        %1259 = vmatprep.subr.bf16.mxu0 0
        %1260 = vmatpush1.bf16.xpose.msra.mxu0 0
        %1261 = vmatprep.subr.bf16.mxu0 0
        %1262 = vmatpush1.bf16.xpose.msra.mxu0 0
        %1263 = vmatprep.subr.bf16.mxu0 0
        %1264 = vmatpush1.bf16.xpose.msra.mxu0 0
        %1265 = vmatprep.mubr.bf16.mxu0 0
        %1266 = vmatmul.mubr.bf16.gmra.mrb[0].mxu0 %v1228
        %v1267 = vpop.f32.mrb[0].mxu0
        %v1268 = vadd.f32 %v994, %v1267
        %v1269 = vpop.f32.mrb[0].mxu0
        %v1270 = vpop.f32.mrb[0].mxu0
        %v1271 = vpop.f32.mrb[0].mxu0
        %1272 = vdwg.mxu0
        %v1273 = vsel %vm998, %v1268, -inf
        %1274 = vmax.xlane.f32.xlu0 %v1273
        %v1275 = vpop.xlane.xlu0 %1274
        %v1276 = vsub.f32 %v1268, %v1275
        %v1277 = vmul.f32 %v1276, 1.442695
        %v1278 = vpow.pop %v1277
        %v1279 = vsel %vm998, %v1278, 0.0
        %1280 = vadd.xlane.f32.xlu0 %v1279
        %v1281 = vpop.xlane.xlu0 %1280
        %v1282 = vrcp.pop %v1281
        %v1283 = vmul.f32 %v1278, %v1282
        %v1284 = vpack.c.bf16 %v1283, %v1283
        %s1285 = scalar_lea.vmem %s754, 8 [#allocation18]
        %1286 = vst.msk [vmem:[%s1285] sm:$0xf] %vm1057, %v1284
        %1287 = vrot.lane.b32.xlu0 %v997, 112
        %v1288 = vpop.permute.xlu0 %1287
        %v1290 = vsel %vm998, %v1284, 0
        %v1293 = vsel %vm1062, %v1288, 0
        %1295 = vmatprep.subr.bf16.mxu0 0
        %1296 = vmatpush1.bf16.msra.mxu0 %v1293
        %1297 = vmatprep.subr.bf16.mxu0 0
        %1298 = vmatpush1.bf16.msra.mxu0 0
        %1299 = vmatprep.subr.bf16.mxu0 0
        %1300 = vmatpush1.bf16.msra.mxu0 0
        %1301 = vmatprep.subr.bf16.mxu0 0
        %1302 = vmatpush1.bf16.msra.mxu0 0
        %1303 = vmatprep.subr.bf16.mxu0 0
        %1304 = vmatpush1.bf16.msra.mxu0 0
        %1305 = vmatprep.subr.bf16.mxu0 0
        %1306 = vmatpush1.bf16.msra.mxu0 0
        %1307 = vmatprep.subr.bf16.mxu0 0
        %1308 = vmatpush1.bf16.msra.mxu0 0
        %1309 = vmatprep.subr.bf16.mxu0 0
        %1310 = vmatpush1.bf16.msra.mxu0 0
        %1311 = vmatprep.subr.bf16.mxu0 0
        %1312 = vmatpush1.bf16.msra.mxu0 0
        %1313 = vmatprep.subr.bf16.mxu0 0
        %1314 = vmatpush1.bf16.msra.mxu0 0
        %1315 = vmatprep.subr.bf16.mxu0 0
        %1316 = vmatpush1.bf16.msra.mxu0 0
        %1317 = vmatprep.subr.bf16.mxu0 0
        %1318 = vmatpush1.bf16.msra.mxu0 0
        %1319 = vmatprep.subr.bf16.mxu0 0
        %1320 = vmatpush1.bf16.msra.mxu0 0
        %1321 = vmatprep.subr.bf16.mxu0 0
        %1322 = vmatpush1.bf16.msra.mxu0 0
        %1323 = vmatprep.subr.bf16.mxu0 0
        %1324 = vmatpush1.bf16.msra.mxu0 0
        %1325 = vmatprep.subr.bf16.mxu0 0
        %1326 = vmatpush1.bf16.msra.mxu0 0
        %1327 = vmatprep.mubr.bf16.mxu0 0
        %1328 = vmatmul.mubr.bf16.gmra.mrb[0].mxu0 %v1290
        %v1329 = vpop.f32.mrb[0].mxu0
        %v1330 = vadd.f32 0.0, %v1329
        %v1331 = vpop.f32.mrb[0].mxu0
        %v1332 = vpop.f32.mrb[0].mxu0
        %v1333 = vpop.f32.mrb[0].mxu0
        %1334 = vdwg.mxu0
        %v1335 = vpack.c.bf16 %v1330, %v1330
        %1336 = vrot.lane.b32.xlu0 %v995, 104
        %v1337 = vpop.permute.xlu0 %1336
        %1338 = vrot.lane.b32.xlu0 %v996, 104
        %v1339 = vpop.permute.xlu0 %1338
        %v1341 = vsel %vm998, %v1337, 0
        %v1344 = vsel %vm998, %v1339, 0
        %1346 = vmatprep.subr.bf16.mxu0 0
        %1347 = vmatpush1.bf16.xpose.msra.mxu0 %v1344
        %1348 = vmatprep.subr.bf16.mxu0 0
        %1349 = vmatpush1.bf16.xpose.msra.mxu0 0
        %1350 = vmatprep.subr.bf16.mxu0 0
        %1351 = vmatpush1.bf16.xpose.msra.mxu0 0
        %1352 = vmatprep.subr.bf16.mxu0 0
        %1353 = vmatpush1.bf16.xpose.msra.mxu0 0
        %1354 = vmatprep.subr.bf16.mxu0 0
        %1355 = vmatpush1.bf16.xpose.msra.mxu0 0
        %1356 = vmatprep.subr.bf16.mxu0 0
        %1357 = vmatpush1.bf16.xpose.msra.mxu0 0
        %1358 = vmatprep.subr.bf16.mxu0 0
        %1359 = vmatpush1.bf16.xpose.msra.mxu0 0
        %1360 = vmatprep.subr.bf16.mxu0 0
        %1361 = vmatpush1.bf16.xpose.msra.mxu0 0
        %1362 = vmatprep.subr.bf16.mxu0 0
        %1363 = vmatpush1.bf16.xpose.msra.mxu0 0
        %1364 = vmatprep.subr.bf16.mxu0 0
        %1365 = vmatpush1.bf16.xpose.msra.mxu0 0
        %1366 = vmatprep.subr.bf16.mxu0 0
        %1367 = vmatpush1.bf16.xpose.msra.mxu0 0
        %1368 = vmatprep.subr.bf16.mxu0 0
        %1369 = vmatpush1.bf16.xpose.msra.mxu0 0
        %1370 = vmatprep.subr.bf16.mxu0 0
        %1371 = vmatpush1.bf16.xpose.msra.mxu0 0
        %1372 = vmatprep.subr.bf16.mxu0 0
        %1373 = vmatpush1.bf16.xpose.msra.mxu0 0
        %1374 = vmatprep.subr.bf16.mxu0 0
        %1375 = vmatpush1.bf16.xpose.msra.mxu0 0
        %1376 = vmatprep.subr.bf16.mxu0 0
        %1377 = vmatpush1.bf16.xpose.msra.mxu0 0
        %1378 = vmatprep.mubr.bf16.mxu0 0
        %1379 = vmatmul.mubr.bf16.gmra.mrb[0].mxu0 %v1341
        %v1380 = vpop.f32.mrb[0].mxu0
        %v1381 = vadd.f32 %v994, %v1380
        %v1382 = vpop.f32.mrb[0].mxu0
        %v1383 = vpop.f32.mrb[0].mxu0
        %v1384 = vpop.f32.mrb[0].mxu0
        %1385 = vdwg.mxu0
        %v1386 = vsel %vm998, %v1381, -inf
        %1387 = vmax.xlane.f32.xlu0 %v1386
        %v1388 = vpop.xlane.xlu0 %1387
        %v1389 = vsub.f32 %v1381, %v1388
        %v1390 = vmul.f32 %v1389, 1.442695
        %v1391 = vpow.pop %v1390
        %v1392 = vsel %vm998, %v1391, 0.0
        %1393 = vadd.xlane.f32.xlu0 %v1392
        %v1394 = vpop.xlane.xlu0 %1393
        %v1395 = vrcp.pop %v1394
        %v1396 = vmul.f32 %v1391, %v1395
        %v1397 = vpack.c.bf16 %v1396, %v1396
        %s1398 = scalar_lea.vmem %s754, 12 [#allocation18]
        %1399 = vst.msk [vmem:[%s1398] sm:$0xf] %vm1057, %v1397
        %1400 = vrot.lane.b32.xlu0 %v997, 104
        %v1401 = vpop.permute.xlu0 %1400
        %v1403 = vsel %vm998, %v1397, 0
        %v1406 = vsel %vm1062, %v1401, 0
        %1408 = vmatprep.subr.bf16.mxu0 0
        %1409 = vmatpush1.bf16.msra.mxu0 %v1406
        %1410 = vmatprep.subr.bf16.mxu0 0
        %1411 = vmatpush1.bf16.msra.mxu0 0
        %1412 = vmatprep.subr.bf16.mxu0 0
        %1413 = vmatpush1.bf16.msra.mxu0 0
        %1414 = vmatprep.subr.bf16.mxu0 0
        %1415 = vmatpush1.bf16.msra.mxu0 0
        %1416 = vmatprep.subr.bf16.mxu0 0
        %1417 = vmatpush1.bf16.msra.mxu0 0
        %1418 = vmatprep.subr.bf16.mxu0 0
        %1419 = vmatpush1.bf16.msra.mxu0 0
        %1420 = vmatprep.subr.bf16.mxu0 0
        %1421 = vmatpush1.bf16.msra.mxu0 0
        %1422 = vmatprep.subr.bf16.mxu0 0
        %1423 = vmatpush1.bf16.msra.mxu0 0
        %1424 = vmatprep.subr.bf16.mxu0 0
        %1425 = vmatpush1.bf16.msra.mxu0 0
        %1426 = vmatprep.subr.bf16.mxu0 0
        %1427 = vmatpush1.bf16.msra.mxu0 0
        %1428 = vmatprep.subr.bf16.mxu0 0
        %1429 = vmatpush1.bf16.msra.mxu0 0
        %1430 = vmatprep.subr.bf16.mxu0 0
        %1431 = vmatpush1.bf16.msra.mxu0 0
        %1432 = vmatprep.subr.bf16.mxu0 0
        %1433 = vmatpush1.bf16.msra.mxu0 0
        %1434 = vmatprep.subr.bf16.mxu0 0
        %1435 = vmatpush1.bf16.msra.mxu0 0
        %1436 = vmatprep.subr.bf16.mxu0 0
        %1437 = vmatpush1.bf16.msra.mxu0 0
        %1438 = vmatprep.subr.bf16.mxu0 0
        %1439 = vmatpush1.bf16.msra.mxu0 0
        %1440 = vmatprep.mubr.bf16.mxu0 0
        %1441 = vmatmul.mubr.bf16.gmra.mrb[0].mxu0 %v1403
        %v1442 = vpop.f32.mrb[0].mxu0
        %v1443 = vadd.f32 0.0, %v1442
        %v1444 = vpop.f32.mrb[0].mxu0
        %v1445 = vpop.f32.mrb[0].mxu0
        %v1446 = vpop.f32.mrb[0].mxu0
        %1447 = vdwg.mxu0
        %v1448 = vpack.c.bf16 %v1443, %v1443
        %1450 = vrot.lane.b32.xlu0 %v1222, 8
        %v1451 = vpop.permute.xlu0 %1450
        %1453 = vrot.lane.b32.xlu0 %v1335, 16
        %v1454 = vpop.permute.xlu0 %1453
        %1456 = vrot.lane.b32.xlu0 %v1448, 24
        %v1457 = vpop.permute.xlu0 %1456
        %v1460 = vsel %vm998, %v1106, %v1451
        %vm1461 = vcmask 130048
        %v1463 = vsel %vm1461, %v1460, %v1454
        %vm1464 = vcmask 195584
        %v1466 = vsel %vm1464, %v1463, %v1457
        %v1471 = vunpack.c.l.b16 %v795
        %v1472 = vunpack.c.l.b16 %v796
        %v1473 = vunpack.c.l.b16 %v797
        %v1474 = vunpack.c.l.b16 %v798
        %v1475 = vpack.c.b16 %v1472, %v1471
        %v1476 = vpack.c.b16 %v1474, %v1473
        %v1479 = vsel %vm817, %v1466, 0
        %1481 = vmatprep.subr.bf16.mxu0 0
        %1482 = vmatpush1.bf16.msra.mxu0 %v1475
        %1483 = vmatprep.subr.bf16.mxu0 0
        %1484 = vmatpush1.bf16.msra.mxu0 %v1476
        %1485 = vmatprep.subr.bf16.mxu0 0
        %1486 = vmatpush1.bf16.msra.mxu0 0
        %1487 = vmatprep.subr.bf16.mxu0 0
        %1488 = vmatpush1.bf16.msra.mxu0 0
        %1489 = vmatprep.subr.bf16.mxu0 0
        %1490 = vmatpush1.bf16.msra.mxu0 0
        %1491 = vmatprep.subr.bf16.mxu0 0
        %1492 = vmatpush1.bf16.msra.mxu0 0
        %1493 = vmatprep.subr.bf16.mxu0 0
        %1494 = vmatpush1.bf16.msra.mxu0 0
        %1495 = vmatprep.subr.bf16.mxu0 0
        %1496 = vmatpush1.bf16.msra.mxu0 0
        %1497 = vmatprep.subr.bf16.mxu0 0
        %1498 = vmatpush1.bf16.msra.mxu0 0
        %1499 = vmatprep.subr.bf16.mxu0 0
        %1500 = vmatpush1.bf16.msra.mxu0 0
        %1501 = vmatprep.subr.bf16.mxu0 0
        %1502 = vmatpush1.bf16.msra.mxu0 0
        %1503 = vmatprep.subr.bf16.mxu0 0
        %1504 = vmatpush1.bf16.msra.mxu0 0
        %1505 = vmatprep.subr.bf16.mxu0 0
        %1506 = vmatpush1.bf16.msra.mxu0 0
        %1507 = vmatprep.subr.bf16.mxu0 0
        %1508 = vmatpush1.bf16.msra.mxu0 0
        %1509 = vmatprep.subr.bf16.mxu0 0
        %1510 = vmatpush1.bf16.msra.mxu0 0
        %1511 = vmatprep.subr.bf16.mxu0 0
        %1512 = vmatpush1.bf16.msra.mxu0 0
        %1513 = vmatprep.mubr.bf16.mxu0 0
        %1514 = vmatmul.mubr.bf16.gmra.mrb[0].mxu0 %v1479
        %v1515 = vpop.f32.mrb[0].mxu0
        %v1516 = vadd.f32 0.0, %v1515
        %v1517 = vpop.f32.mrb[0].mxu0
        %v1518 = vpop.f32.mrb[0].mxu0
        %v1519 = vpop.f32.mrb[0].mxu0
        %1520 = vdwg.mxu0
        %p1521 = scmp.eq.s32.totalorder %s48, 0
        // Predicated region
        $region105: #{tpu_custom_call.1} parent=71 // pred_check
          %p1522 = pneg %p1521
        $region106: #{tpu_custom_call.1} parent=71 // pred_check_branch
          %1524 = sbr.rel (%p1522) target = $region108
        $region107: #{tpu_custom_call.1} parent=71 // pred_region
          %1525 = vst.msk [vmem:[#allocation2] sm:$0xff] %vm817, 0.0
        $region108: #{tpu_custom_call.1} parent=71 // pred_fallthru
          _
        %v1526 = vld [vmem:[#allocation2] sm:$0xff]
        %v1527 = vadd.f32 %v1526, %v1516
        %1528 = vst.msk [vmem:[#allocation2] sm:$0xff] %vm817, %v1527
        // Predicated region
        $region109: #{tpu_custom_call.1} parent=71 // pred_check
          %p1529 = pneg %p1521
        $region110: #{tpu_custom_call.1} parent=71 // pred_check_branch
          %1531 = sbr.rel (%p1529) target = $region112
        $region111: #{tpu_custom_call.1} parent=71 // pred_region
          %v1532 = vld [vmem:[#allocation2] sm:$0xff]
          %v1533 = vld [vmem:[#allocation15] sm:$0x1]
          %v1534 = vunpack.c.l.bf16 %v1533
          %v1535 = vlaneseq
          %v1536 = vshrl.u32 %v1535, 7
          %v1537 = vsub.s32 0, %v1536
          %v1538 = vrot.slane %v1534, %v1537
          %v1539 = vadd.f32 %v1532, %v1538
          %1540 = vst.msk [vmem:[%s747] sm:$0xff] %vm817, %v1539
        $region112: #{tpu_custom_call.1} parent=71 // pred_fallthru
          _
        %s1541 = sand.u32 %s405, 1
        %s1542 = scalar_lea.sflag [#allocation5], %s1541
        %s1543 = sand.u32 %s405, 1
        %s1544 = smul.addr %s1543, 8
        %s1545 = scalar_lea.vmem [#allocation17], %s1544
        %s1546 = sand.u32 %s435, 1
        %s1547 = scalar_lea.sflag [#allocation19], %s1546
        %s1548 = sand.u32 %s435, 1
        %s1549 = smul.addr %s1548, 16
        %s1550 = scalar_lea.vmem [#allocation18], %s1549
        // Predicated region
        $region113: #{tpu_custom_call.1} parent=71 // pred_check
          %p1551 = pneg %p415
        $region114: #{tpu_custom_call.1} parent=71 // pred_check_branch
          %1553 = sbr.rel (%p1551) target = $region116
        $region115: #{tpu_custom_call.1} parent=71 // pred_region
          %s1555 = ssub.s32 128, 128
          %1556 = vsyncadd %s1542, %s1555
          %s1557 = sadd.s32 %s47, %s46
          %s1558 = smul.addr %s1557, 128
          %s1559 = scalar_lea.hbm %s13, %s1558
          %s1561 = sshll.u32 %s1545, 4
          %s1562 = int_to_ptr.vmem [resolvable:$true] %s1561
          %1564 = dma.vmem_to_hbm [thread:$0]  %s1562, 128, %s1559, %s1542
        $region116: #{tpu_custom_call.1} parent=71 // pred_fallthru
          _
        // Predicated region
        $region117: #{tpu_custom_call.1} parent=71 // pred_check
          %p1565 = pneg %p445
        $region118: #{tpu_custom_call.1} parent=71 // pred_check_branch
          %1567 = sbr.rel (%p1565) target = $region120
        $region119: #{tpu_custom_call.1} parent=71 // pred_region
          %s1568 = smul.u32 4, %s48
          %s1570 = ssub.s32 256, 256
          %1571 = vsyncadd %s1547, %s1570
          %s1572 = sadd.s32 %s47, %s1568
          %s1573 = smul.addr %s46, 4
          %s1574 = sadd.s32 %s1572, %s1573
          %s1575 = smul.addr %s1574, 64
          %s1576 = scalar_lea.hbm %s14, %s1575
          %s1577 = sshll.u32 %s1550, 4
          %s1578 = int_to_ptr.vmem [resolvable:$true] %s1577
          %1583 = dma.vmem_to_hbm [thread:$0]  %s1578, 256, %s1576, %s1547, 64, 64, 4
        $region120: #{tpu_custom_call.1} parent=71 // pred_fallthru
          _
      $region72: #{tpu_custom_call.1} parent=5 // pred_fallthru
        _
      %p1584 = scmp.le.s32.totalorder 2, %s36
      // Predicated region
      $region121: #{tpu_custom_call.1} parent=5 // pred_check
        %p1585 = pneg %p1584
      $region122: #{tpu_custom_call.1} parent=5 // pred_check_branch
        %1587 = sbr.rel (%p1585) target = $region124
      $region123: #{tpu_custom_call.1} parent=5 // pred_region
        %s1588 = ssub.s32 %s36, 2
        // Predicated region
        $region125: #{tpu_custom_call.1} parent=123 // pred_check
          %p1589 = pneg %p421
        $region126: #{tpu_custom_call.1} parent=123 // pred_check_branch
          %1591 = sbr.rel (%p1589) target = $region128
        $region127: #{tpu_custom_call.1} parent=123 // pred_region
          %s1592 = sand.u32 %s406, 1
          %s1593 = scalar_lea.sflag [#allocation5], %s1592
          %s1594 = sand.u32 %s406, 1
          %s1595 = smul.addr %s1594, 8
          %s1596 = scalar_lea.vmem [#allocation17], %s1595
          %1597 = dma.done %s1593, 128
        $region128: #{tpu_custom_call.1} parent=123 // pred_fallthru
          _
        // Predicated region
        $region129: #{tpu_custom_call.1} parent=123 // pred_check
          %p1598 = pneg %p451
        $region130: #{tpu_custom_call.1} parent=123 // pred_check_branch
          %1600 = sbr.rel (%p1598) target = $region132
        $region131: #{tpu_custom_call.1} parent=123 // pred_region
          %s1601 = sand.u32 %s436, 1
          %s1602 = scalar_lea.sflag [#allocation19], %s1601
          %s1603 = sand.u32 %s436, 1
          %s1604 = smul.addr %s1603, 16
          %s1605 = scalar_lea.vmem [#allocation18], %s1604
          %1606 = dma.done %s1602, 256
        $region132: #{tpu_custom_call.1} parent=123 // pred_fallthru
          _
      $region124: #{tpu_custom_call.1} parent=5 // pred_fallthru
        _
    $region6: #{tpu_custom_call.1} parent=1 // loop_footer
      %s40 = sadd.s32 1, %s36
    $region7: #{tpu_custom_call.1} parent=1 // loop_footer_branch
      %35 = sbr.rel target = $region3
    $region8: #{tpu_custom_call.1} parent=1 // loop_exit
      _
    %1607 = vsyncpa [#allocation4], 1
    %s1608 = scalar_lea.sflag [#allocation4], 1
    %1609 = vsyncpa %s1608, 1
    %1610 = vsyncpa [#allocation7], 1
    %s1611 = scalar_lea.sflag [#allocation7], 1
    %1612 = vsyncpa %s1611, 1
    %1613 = vsyncpa [#allocation10], 1
    %1614 = vsyncpa [#allocation13], 1
    %1615 = vsyncpa [#allocation16], 1
    %1616 = vsyncpa [#allocation5], 1
    %s1617 = scalar_lea.sflag [#allocation5], 1
    %1618 = vsyncpa %s1617, 1
    %1619 = vsyncpa [#allocation19], 1
    %s1620 = scalar_lea.sflag [#allocation19], 1
    %1621 = vsyncpa %s1620, 1

</llo_original>
